<compile_context>
chip_gen: v6e
topology: v6e:2x2x1
jax: 0.10.0
libtpu: 0.0.40
codegen_flags: <defaults>
</compile_context>

<pallas_src>
import functools

import jax
import jax.numpy as jnp
from jax.experimental import pallas as pl
from jax.experimental.pallas import tpu as pltpu


# --------------------------------------------------------------------------
# Kernel 1: fused 5-layer GIN stack.  grid=(L,), one layer per grid step.
#   h_{l+1} = ReLU(Lin2_l(ReLU(Lin1_l'((1+eps)*h_l + A @ h_l))))
# with eps = 0 and BatchNorm folded into Lin1'.
# A and x use constant index maps (resident in VMEM), per-layer weights are
# streamed from the stacked (L, P, P) arrays, activations carried in scratch.
# --------------------------------------------------------------------------
def gin_stack_kernel(a_ref, x_ref, w1_ref, b1_ref, w2_ref, b2_ref,
                     o_ref, act_ref):
    l = pl.program_id(0)

    @pl.when(l == 0)
    def _():
        act_ref[...] = x_ref[...]

    h = act_ref[...]
    # Aggregation on the MXU in bf16 (A is bf16; exact for small edge counts),
    # f32 accumulation, plus the (1+eps)*x self term with eps = 0.
    agg = jnp.dot(a_ref[...], h.astype(jnp.bfloat16),
                  preferred_element_type=jnp.float32) + h
    # Lin1 with eval-mode BatchNorm folded in, then ReLU.
    h1 = jnp.dot(agg, w1_ref[0], preferred_element_type=jnp.float32) + b1_ref[0]
    h1 = jnp.maximum(h1, 0.0)
    # Lin2 + ReLU.
    h2 = jnp.dot(h1, w2_ref[0], preferred_element_type=jnp.float32) + b2_ref[0]
    h2 = jnp.maximum(h2, 0.0)
    act_ref[...] = h2

    @pl.when(l == pl.num_programs(0) - 1)
    def _():
        o_ref[...] = h2


# --------------------------------------------------------------------------
# Kernel 2: Graffin block on LayerNorm(seq_reverse):
#   xn = LayerNorm(x)                       (over the true feature dim)
#   l  = GELU(llin(xn))                     (Dropout -> identity)
#   r  = GRU(rlin(xn))                      (single layer, h0 = 0)
#   out = l * r                             (Dropout -> identity)
# GRU gates use fused 3-gate weights; hidden state is a fori_loop carry.
# --------------------------------------------------------------------------
def graffin_kernel(x_ref, lng_ref, lnb_ref, wl_ref, bl_ref, wr_ref, br_ref,
                   wi3_ref, bi3_ref, wh3_ref, bh3_ref,
                   o_ref, gi_scr, h_scr, *, feat):
    n = x_ref.shape[0]
    P = o_ref.shape[1]

    # LayerNorm over the valid feature columns only (padded cols are zero).
    x = x_ref[...]
    mask = (jax.lax.broadcasted_iota(jnp.int32, (1, x.shape[1]), 1)
            < feat).astype(jnp.float32)
    mu = jnp.sum(x, axis=-1, keepdims=True) * (1.0 / feat)
    xc = (x - mu) * mask
    var = jnp.sum(xc * xc, axis=-1, keepdims=True) * (1.0 / feat)
    xn = xc * jax.lax.rsqrt(var + 1e-5) * lng_ref[...] + lnb_ref[...]

    # Left branch: Linear -> exact (erf) GELU.  Held as a value (2 vregs).
    lpre = jnp.dot(xn, wl_ref[...], preferred_element_type=jnp.float32) + bl_ref[...]
    l_val = 0.5 * lpre * (1.0 + jax.lax.erf(lpre * 0.7071067811865476))

    # Right branch: Linear, then all 3 input-gate projections as ONE matmul.
    rx = jnp.dot(xn, wr_ref[...], preferred_element_type=jnp.float32) + br_ref[...]
    gi_scr[...] = jnp.dot(rx, wi3_ref[...],
                          preferred_element_type=jnp.float32) + bi3_ref[...]

    wh3 = wh3_ref[...]
    bh3 = bh3_ref[...]

    def step(t, h):
        # One fused (1,P)@(P,3P) matmul per step for all hidden-gate terms.
        gh = jnp.dot(h, wh3, preferred_element_type=jnp.float32) + bh3
        gi = gi_scr[pl.ds(t, 1), :]
        r = jax.nn.sigmoid(gi[:, :P] + gh[:, :P])
        z = jax.nn.sigmoid(gi[:, P:2 * P] + gh[:, P:2 * P])
        c = jnp.tanh(gi[:, 2 * P:] + r * gh[:, 2 * P:])   # b_hn lives in gh
        h_new = (1.0 - z) * c + z * h
        h_scr[pl.ds(t, 1), :] = h_new
        return h_new

    jax.lax.fori_loop(0, n, step, jnp.zeros((1, P), jnp.float32))

    # Single lane-dense elementwise pass + bulk store after the loop.
    o_ref[...] = l_val * h_scr[...]


# --------------------------------------------------------------------------
# Kernel 3: head:  y = x * seq;  h = ReLU(lin1(y));  (Dropout -> identity)
#                  logits = lin2(h);  out = log_softmax(logits, dim=1)
# Padded class columns carry a -1e9 bias so they vanish from the softmax.
# --------------------------------------------------------------------------
def head_kernel(x_ref, s_ref, w1_ref, b1_ref, w2_ref, b2_ref, o_ref):
    y = x_ref[...] * s_ref[...]
    h = jnp.maximum(
        jnp.dot(y, w1_ref[...], preferred_element_type=jnp.float32) + b1_ref[...],
        0.0)
    logits = jnp.dot(h, w2_ref[...], preferred_element_type=jnp.float32) + b2_ref[...]
    m = jnp.max(logits, axis=-1, keepdims=True)
    lse = jnp.log(jnp.sum(jnp.exp(logits - m), axis=-1, keepdims=True)) + m
    o_ref[...] = logits - lse


# --------------------------------------------------------------------------
# Wrappers
# --------------------------------------------------------------------------
def _vmem_specs(n):
    return [pl.BlockSpec(memory_space=pltpu.MemorySpace.VMEM) for _ in range(n)]


def gin_stack(adj_bf16, xp, p):
    n, P = xp.shape
    L = p["w1"].shape[0]
    return pl.pallas_call(
        gin_stack_kernel,
        out_shape=jax.ShapeDtypeStruct((n, P), jnp.float32),
        grid_spec=pltpu.PrefetchScalarGridSpec(
            num_scalar_prefetch=0,
            grid=(L,),
            in_specs=[
                pl.BlockSpec((n, n), lambda l: (0, 0)),        # A: resident
                pl.BlockSpec((n, P), lambda l: (0, 0)),        # x: resident
                pl.BlockSpec((1, P, P), lambda l: (l, 0, 0)),  # w1 per layer
                pl.BlockSpec((1, 1, P), lambda l: (l, 0, 0)),  # b1 per layer
                pl.BlockSpec((1, P, P), lambda l: (l, 0, 0)),  # w2 per layer
                pl.BlockSpec((1, 1, P), lambda l: (l, 0, 0)),  # b2 per layer
            ],
            out_specs=pl.BlockSpec((n, P), lambda l: (0, 0)),
            scratch_shapes=[pltpu.VMEM((n, P), jnp.float32)],  # activations
        ),
        compiler_params=pltpu.CompilerParams(
            dimension_semantics=("arbitrary",),
            vmem_limit_bytes=32 << 20),
    )(adj_bf16, xp, p["w1"], p["b1"], p["w2"], p["b2"])


def graffin(seq_padded, p, *, feat):
    n, P = seq_padded.shape
    kern = functools.partial(graffin_kernel, feat=feat)
    return pl.pallas_call(
        kern,
        out_shape=jax.ShapeDtypeStruct((n, P), jnp.float32),
        in_specs=_vmem_specs(11),
        out_specs=pl.BlockSpec(memory_space=pltpu.MemorySpace.VMEM),
        scratch_shapes=[
            pltpu.VMEM((n, 3 * P), jnp.float32),  # fused 3-gate input proj.
            pltpu.VMEM((n, P), jnp.float32),      # all GRU hidden states
        ],
        compiler_params=pltpu.CompilerParams(vmem_limit_bytes=32 << 20),
    )(seq_padded, p["ln_g"], p["ln_b"], p["wl"], p["bl"], p["wr"], p["br"],
      p["wi3"], p["bi3"], p["wh3"], p["bh3"])


def head(x, seq_aligned, p):
    n = x.shape[0]
    cp = p["w2"].shape[1]
    return pl.pallas_call(
        head_kernel,
        out_shape=jax.ShapeDtypeStruct((n, cp), jnp.float32),
        in_specs=_vmem_specs(6),
        out_specs=pl.BlockSpec(memory_space=pltpu.MemorySpace.VMEM),
        compiler_params=pltpu.CompilerParams(vmem_limit_bytes=32 << 20),
    )(x, seq_aligned, p["w1"], p["b1"], p["w2"], p["b2"])


@functools.partial(jax.jit, static_argnames=("feat", "num_class"))
def imbgnn_forward(x, edge_index, seq_reverse, seqid_reverse, params, *,
                   feat, num_class):
    n = x.shape[0]
    P = params["gin"]["w1"].shape[-1]

    # Dense adjacency (A[dst, src] += 1) in bf16 (exact for multiplicity<=256).
    adj = (jnp.zeros((n, n), jnp.float32)
           .at[edge_index[1], edge_index[0]].add(1.0)
           .astype(jnp.bfloat16))

    # Zero-pad features to the lane-dense width P.
    xp = jnp.pad(x, ((0, 0), (0, P - x.shape[1])))
    seqp = jnp.pad(seq_reverse, ((0, 0), (0, P - seq_reverse.shape[1])))

    # seq branch: LayerNorm + Graffin (LayerNorm folded into the kernel).
    seq_out = graffin(seqp, params["graffin"], feat=feat)

    # tseqid_reverse[seqid_reverse[i]] = i ; then gather rows (glue, not hot).
    inv = jnp.zeros((n,), jnp.int32).at[seqid_reverse].set(
        jnp.arange(n, dtype=jnp.int32))
    seq_aligned = seq_out[inv]

    # 5 fused GINConv layers (use_drop=False -> no dropout after conv1).
    h = gin_stack(adj, xp, params["gin"])

    # x * seq -> lin1 -> relu -> (dropout) -> lin2 -> log_softmax.
    out = head(h, seq_aligned, params["head"])
    return out[:, :num_class]


# --------------------------------------------------------------------------
# Deterministic parameter construction (padded, BN-folded, gate-fused).
# --------------------------------------------------------------------------
def _rup(v, m=128):
    return ((v + m - 1) // m) * m


def _linear(key, fan_in, fan_out):
    k1, k2 = jax.random.split(key)
    bound = 1.0 / float(fan_in) ** 0.5
    w = jax.random.uniform(k1, (fan_in, fan_out), jnp.float32, -bound, bound)
    b = jax.random.uniform(k2, (1, fan_out), jnp.float32, -bound, bound)
    return w, b


def _pad(a, r, c):
    return jnp.pad(a, ((0, r - a.shape[0]), (0, c - a.shape[1])))


def _gin_layer(key, f_in, hid, P):
    k1, k2 = jax.random.split(key)
    w1, b1 = _linear(k1, f_in, hid)
    w2, b2 = _linear(k2, hid, hid)
    # Fold eval-mode BatchNorm1d (fresh running stats) into Lin1.
    gamma = jnp.ones((1, hid), jnp.float32)
    beta = jnp.zeros((1, hid), jnp.float32)
    mean = jnp.zeros((1, hid), jnp.float32)
    var = jnp.ones((1, hid), jnp.float32)
    scale = gamma * jax.lax.rsqrt(var + 1e-5)
    w1f = w1 * scale
    b1f = (b1 - mean) * scale + beta
    return (_pad(w1f, P, P), _pad(b1f, 1, P), _pad(w2, P, P), _pad(b2, 1, P))


def _graffin_params(key, feat, hid, P):
    ks = jax.random.split(key, 3)
    wl, bl = _linear(ks[0], feat, hid)
    wr, br = _linear(ks[1], feat, hid)
    bound = 1.0 / float(hid) ** 0.5
    kk = jax.random.split(ks[2], 12)

    def gw(k):
        return jax.random.uniform(k, (hid, hid), jnp.float32, -bound, bound)

    def gb(k):
        return jax.random.uniform(k, (1, hid), jnp.float32, -bound, bound)

    wir, wiz, win = gw(kk[0]), gw(kk[1]), gw(kk[2])
    bir, biz, bin_ = gb(kk[3]), gb(kk[4]), gb(kk[5])
    whr, whz, whn = gw(kk[6]), gw(kk[7]), gw(kk[8])
    bhr, bhz, bhn = gb(kk[9]), gb(kk[10]), gb(kk[11])

    pw = lambda m: _pad(m, P, P)
    pb = lambda v: _pad(v, 1, P)
    return dict(
        ln_g=_pad(jnp.ones((1, feat), jnp.float32), 1, P),
        ln_b=jnp.zeros((1, P), jnp.float32),
        wl=pw(wl), bl=pb(bl), wr=pw(wr), br=pb(br),
        wi3=jnp.concatenate([pw(wir), pw(wiz), pw(win)], axis=1),
        bi3=jnp.concatenate([pb(bir), pb(biz), pb(bin_)], axis=1),
        wh3=jnp.concatenate([pw(whr), pw(whz), pw(whn)], axis=1),
        bh3=jnp.concatenate([pb(bhr), pb(bhz), pb(bhn)], axis=1),
    )


def init_params(key, feature_size, hidden_size, num_class):
    P = max(_rup(feature_size), _rup(hidden_size))
    Cp = _rup(num_class)
    ks = jax.random.split(key, 8)

    layers = [_gin_layer(ks[0], feature_size, hidden_size, P)]
    layers += [_gin_layer(ks[i], hidden_size, hidden_size, P)
               for i in range(1, 5)]
    gin = dict(
        w1=jnp.stack([l[0] for l in layers]),            # (5, P, P)
        b1=jnp.stack([l[1] for l in layers]),            # (5, 1, P)
        w2=jnp.stack([l[2] for l in layers]),            # (5, P, P)
        b2=jnp.stack([l[3] for l in layers]),            # (5, 1, P)
    )

    w1, b1 = _linear(ks[6], hidden_size, hidden_size)
    w2, b2 = _linear(ks[7], hidden_size, num_class)
    head_p = dict(
        w1=_pad(w1, P, P), b1=_pad(b1, 1, P),
        w2=_pad(w2, P, Cp),
        # padded class columns get a huge negative bias -> drop out of softmax
        b2=jnp.full((1, Cp), -1e9, jnp.float32).at[:, :num_class].set(b2),
    )

    return dict(
        gin=gin,
        graffin=_graffin_params(ks[5], feature_size, hidden_size, P),
        head=head_p,
    )


if __name__ == "__main__":
    N_NODES, FEAT, HID, N_CLASS, N_EDGES = 16, 32, 32, 4, 40

    key = jax.random.PRNGKey(0)
    ks = jax.random.split(key, 6)

    x = jax.random.normal(ks[0], (N_NODES, FEAT), jnp.float32)
    seq_reverse = jax.random.normal(ks[1], (N_NODES, FEAT), jnp.float32)
    seqid_reverse = jax.random.permutation(ks[2], N_NODES).astype(jnp.int32)
    src = jax.random.randint(ks[3], (N_EDGES,), 0, N_NODES, dtype=jnp.int32)
    dst = jax.random.randint(ks[4], (N_EDGES,), 0, N_NODES, dtype=jnp.int32)
    edge_index = jnp.stack([src, dst], axis=0)

    params = init_params(ks[5], FEAT, HID, N_CLASS)

    out = imbgnn_forward(x, edge_index, seq_reverse, seqid_reverse, params,
                         feat=FEAT, num_class=N_CLASS)
    jax.block_until_ready(out)
    assert out.shape == (N_NODES, N_CLASS)
    print("KERNEL_OK")
</pallas_src>

<mosaic_0001>
module attributes {stable_mosaic.version = 11 : i64} {
  func.func private @main(%arg0: i32) attributes {dimension_semantics = [#tpu.dimension_semantics<core_parallel>], iteration_bounds = array<i64: 2>, tpu.core_type = #tpu.core_type<sc_scalar_subcore>, window_params = []} {
    return
  }
}

module attributes {stable_mosaic.version = 11 : i64} {
  func.func private @main(%arg0: i32) attributes {dimension_semantics = [#tpu.dimension_semantics<core_parallel>], iteration_bounds = array<i64: 2>, tpu.core_type = #tpu.core_type<sc_scalar_subcore>, window_params = []} {
    return
  }
}

module attributes {stable_mosaic.version = 11 : i64} {
  func.func @graffin_kernel(%arg0: memref<16x128xf32, #tpu.memory_space<vmem>>, %arg1: memref<1x128xf32, #tpu.memory_space<vmem>>, %arg2: memref<1x128xf32, #tpu.memory_space<vmem>>, %arg3: memref<128x128xf32, #tpu.memory_space<vmem>>, %arg4: memref<1x128xf32, #tpu.memory_space<vmem>>, %arg5: memref<128x128xf32, #tpu.memory_space<vmem>>, %arg6: memref<1x128xf32, #tpu.memory_space<vmem>>, %arg7: memref<128x384xf32, #tpu.memory_space<vmem>>, %arg8: memref<1x384xf32, #tpu.memory_space<vmem>>, %arg9: memref<128x384xf32, #tpu.memory_space<vmem>>, %arg10: memref<1x384xf32, #tpu.memory_space<vmem>>, %arg11: memref<16x128xf32, #tpu.memory_space<vmem>>, %arg12: memref<16x384xf32, #tpu.memory_space<vmem>>, %arg13: memref<16x128xf32, #tpu.memory_space<vmem>>) attributes {dimension_semantics = [], scalar_prefetch = 0 : i64, scratch_operands = 2 : i64, tpu.core_type = #tpu.core_type<tc>} {
    %c0 = arith.constant 0 : index
    %c0_0 = arith.constant 0 : index
    %0 = vector.load %arg0[%c0, %c0_0] : memref<16x128xf32, #tpu.memory_space<vmem>>, vector<16x128xf32>
    %1 = tpu.iota {dimensions = array<i32: 1>} : vector<1x128xi32>
    %c32_i32 = arith.constant 32 : i32
    %2 = vector.broadcast %c32_i32 : i32 to vector<1x128xi32>
    %3 = arith.cmpi slt, %1, %2 : vector<1x128xi32>
    %4 = arith.extui %3 : vector<1x128xi1> to vector<1x128xi32>
    %5 = arith.sitofp %4 : vector<1x128xi32> to vector<1x128xf32>
    %cst = arith.constant dense<0.000000e+00> : vector<16xf32>
    %6 = vector.multi_reduction <add>, %0, %cst [1] : vector<16x128xf32> to vector<16xf32>
    %7 = vector.shape_cast %6 : vector<16xf32> to vector<16x1xf32>
    %cst_1 = arith.constant 3.125000e-02 : f32
    %8 = vector.broadcast %cst_1 : f32 to vector<16x1xf32>
    %9 = arith.mulf %7, %8 : vector<16x1xf32>
    %10 = vector.broadcast %9 : vector<16x1xf32> to vector<16x128xf32>
    %11 = arith.subf %0, %10 : vector<16x128xf32>
    %12 = vector.broadcast %5 : vector<1x128xf32> to vector<16x128xf32>
    %13 = arith.mulf %11, %12 : vector<16x128xf32>
    %14 = arith.mulf %13, %13 : vector<16x128xf32>
    %cst_2 = arith.constant dense<0.000000e+00> : vector<16xf32>
    %15 = vector.multi_reduction <add>, %14, %cst_2 [1] : vector<16x128xf32> to vector<16xf32>
    %16 = vector.shape_cast %15 : vector<16xf32> to vector<16x1xf32>
    %cst_3 = arith.constant 3.125000e-02 : f32
    %17 = vector.broadcast %cst_3 : f32 to vector<16x1xf32>
    %18 = arith.mulf %16, %17 : vector<16x1xf32>
    %cst_4 = arith.constant 9.99999974E-6 : f32
    %19 = vector.broadcast %cst_4 : f32 to vector<16x1xf32>
    %20 = arith.addf %18, %19 : vector<16x1xf32>
    %21 = math.rsqrt %20 : vector<16x1xf32>
    %22 = vector.broadcast %21 : vector<16x1xf32> to vector<16x128xf32>
    %23 = arith.mulf %13, %22 : vector<16x128xf32>
    %c0_5 = arith.constant 0 : index
    %c0_6 = arith.constant 0 : index
    %24 = vector.load %arg1[%c0_5, %c0_6] : memref<1x128xf32, #tpu.memory_space<vmem>>, vector<1x128xf32>
    %25 = vector.broadcast %24 : vector<1x128xf32> to vector<16x128xf32>
    %26 = arith.mulf %23, %25 : vector<16x128xf32>
    %c0_7 = arith.constant 0 : index
    %c0_8 = arith.constant 0 : index
    %27 = vector.load %arg2[%c0_7, %c0_8] : memref<1x128xf32, #tpu.memory_space<vmem>>, vector<1x128xf32>
    %28 = vector.broadcast %27 : vector<1x128xf32> to vector<16x128xf32>
    %29 = arith.addf %26, %28 : vector<16x128xf32>
    %c0_9 = arith.constant 0 : index
    %c0_10 = arith.constant 0 : index
    %30 = vector.load %arg3[%c0_9, %c0_10] : memref<128x128xf32, #tpu.memory_space<vmem>>, vector<128x128xf32>
    %cst_11 = arith.constant dense<0.000000e+00> : vector<16x128xf32>
    %31 = tpu.matmul %29, %30, %cst_11 {dimension_numbers = #tpu.dot_dimension_numbers<[1], [0], [0], [1], [0, 0, 1, 1], [], []>} : vector<16x128xf32>, vector<128x128xf32>, vector<16x128xf32> -> vector<16x128xf32>
    %c0_12 = arith.constant 0 : index
    %c0_13 = arith.constant 0 : index
    %32 = vector.load %arg4[%c0_12, %c0_13] : memref<1x128xf32, #tpu.memory_space<vmem>>, vector<1x128xf32>
    %33 = vector.broadcast %32 : vector<1x128xf32> to vector<16x128xf32>
    %34 = arith.addf %31, %33 : vector<16x128xf32>
    %cst_14 = arith.constant 5.000000e-01 : f32
    %35 = vector.broadcast %cst_14 : f32 to vector<16x128xf32>
    %36 = arith.mulf %35, %34 : vector<16x128xf32>
    %cst_15 = arith.constant 0.707106769 : f32
    %37 = vector.broadcast %cst_15 : f32 to vector<16x128xf32>
    %38 = arith.mulf %34, %37 : vector<16x128xf32>
    %39 = math.erf %38 : vector<16x128xf32>
    %cst_16 = arith.constant 1.000000e+00 : f32
    %40 = vector.broadcast %cst_16 : f32 to vector<16x128xf32>
    %41 = arith.addf %40, %39 : vector<16x128xf32>
    %42 = arith.mulf %36, %41 : vector<16x128xf32>
    %c0_17 = arith.constant 0 : index
    %c0_18 = arith.constant 0 : index
    %43 = vector.load %arg5[%c0_17, %c0_18] : memref<128x128xf32, #tpu.memory_space<vmem>>, vector<128x128xf32>
    %cst_19 = arith.constant dense<0.000000e+00> : vector<16x128xf32>
    %44 = tpu.matmul %29, %43, %cst_19 {dimension_numbers = #tpu.dot_dimension_numbers<[1], [0], [0], [1], [0, 0, 1, 1], [], []>} : vector<16x128xf32>, vector<128x128xf32>, vector<16x128xf32> -> vector<16x128xf32>
    %c0_20 = arith.constant 0 : index
    %c0_21 = arith.constant 0 : index
    %45 = vector.load %arg6[%c0_20, %c0_21] : memref<1x128xf32, #tpu.memory_space<vmem>>, vector<1x128xf32>
    %46 = vector.broadcast %45 : vector<1x128xf32> to vector<16x128xf32>
    %47 = arith.addf %44, %46 : vector<16x128xf32>
    %c0_22 = arith.constant 0 : index
    %c0_23 = arith.constant 0 : index
    %48 = vector.load %arg7[%c0_22, %c0_23] : memref<128x384xf32, #tpu.memory_space<vmem>>, vector<128x384xf32>
    %cst_24 = arith.constant dense<0.000000e+00> : vector<16x384xf32>
    %49 = tpu.matmul %47, %48, %cst_24 {dimension_numbers = #tpu.dot_dimension_numbers<[1], [0], [0], [1], [0, 0, 1, 1], [], []>} : vector<16x128xf32>, vector<128x384xf32>, vector<16x384xf32> -> vector<16x384xf32>
    %c0_25 = arith.constant 0 : index
    %c0_26 = arith.constant 0 : index
    %50 = vector.load %arg8[%c0_25, %c0_26] : memref<1x384xf32, #tpu.memory_space<vmem>>, vector<1x384xf32>
    %51 = vector.broadcast %50 : vector<1x384xf32> to vector<16x384xf32>
    %52 = arith.addf %49, %51 : vector<16x384xf32>
    %c0_27 = arith.constant 0 : index
    %c0_28 = arith.constant 0 : index
    %53 = vector.load %arg12[%c0_27, %c0_28] : memref<16x384xf32, #tpu.memory_space<vmem>>, vector<16x384xf32>
    tpu.vector_store %arg12[%c0_27, %c0_28], %52 {strides = array<i32>} : memref<16x384xf32, #tpu.memory_space<vmem>>, vector<16x384xf32>,
    %c0_29 = arith.constant 0 : index
    %c0_30 = arith.constant 0 : index
    %54 = vector.load %arg9[%c0_29, %c0_30] : memref<128x384xf32, #tpu.memory_space<vmem>>, vector<128x384xf32>
    %c0_31 = arith.constant 0 : index
    %c0_32 = arith.constant 0 : index
    %55 = vector.load %arg10[%c0_31, %c0_32] : memref<1x384xf32, #tpu.memory_space<vmem>>, vector<1x384xf32>
    %cst_33 = arith.constant 0.000000e+00 : f32
    %56 = vector.broadcast %cst_33 : f32 to vector<1x128xf32>
    %c0_i32 = arith.constant 0 : i32
    %c16_i32 = arith.constant 16 : i32
    %57 = arith.addi %c0_i32, %c16_i32 : i32
    %c1_i32 = arith.constant 1 : i32
    %58 = scf.for %arg14 = %c0_i32 to %57 step %c1_i32 iter_args(%arg15 = %56) -> (vector<1x128xf32>)  : i32 {
      %cst_39 = arith.constant dense<0.000000e+00> : vector<1x384xf32>
      %62 = tpu.matmul %arg15, %54, %cst_39 {dimension_numbers = #tpu.dot_dimension_numbers<[1], [0], [0], [1], [0, 0, 1, 1], [], []>} : vector<1x128xf32>, vector<128x384xf32>, vector<1x384xf32> -> vector<1x384xf32>
      %63 = arith.addf %62, %55 : vector<1x384xf32>
      %64 = arith.index_cast %arg14 : i32 to index
      %c0_40 = arith.constant 0 : index
      %65 = vector.load %arg12[%64, %c0_40] : memref<16x384xf32, #tpu.memory_space<vmem>>, vector<1x384xf32>
      %66 = vector.extract_strided_slice %65 {offsets = [0, 0], sizes = [1, 128], strides = [1, 1]} : vector<1x384xf32> to vector<1x128xf32>
      %67 = vector.extract_strided_slice %63 {offsets = [0, 0], sizes = [1, 128], strides = [1, 1]} : vector<1x384xf32> to vector<1x128xf32>
      %68 = arith.addf %66, %67 : vector<1x128xf32>
      %69 = arith.negf %68 : vector<1x128xf32>
      %70 = math.exp %69 : vector<1x128xf32>
      %cst_41 = arith.constant 1.000000e+00 : f32
      %71 = vector.broadcast %cst_41 : f32 to vector<1x128xf32>
      %72 = arith.addf %71, %70 : vector<1x128xf32>
      %73 = arith.divf %71, %72 : vector<1x128xf32>
      %74 = vector.extract_strided_slice %65 {offsets = [0, 128], sizes = [1, 128], strides = [1, 1]} : vector<1x384xf32> to vector<1x128xf32>
      %75 = vector.extract_strided_slice %63 {offsets = [0, 128], sizes = [1, 128], strides = [1, 1]} : vector<1x384xf32> to vector<1x128xf32>
      %76 = arith.addf %74, %75 : vector<1x128xf32>
      %77 = arith.negf %76 : vector<1x128xf32>
      %78 = math.exp %77 : vector<1x128xf32>
      %cst_42 = arith.constant 1.000000e+00 : f32
      %79 = vector.broadcast %cst_42 : f32 to vector<1x128xf32>
      %80 = arith.addf %79, %78 : vector<1x128xf32>
      %81 = arith.divf %79, %80 : vector<1x128xf32>
      %82 = vector.extract_strided_slice %65 {offsets = [0, 256], sizes = [1, 128], strides = [1, 1]} : vector<1x384xf32> to vector<1x128xf32>
      %83 = vector.extract_strided_slice %63 {offsets = [0, 256], sizes = [1, 128], strides = [1, 1]} : vector<1x384xf32> to vector<1x128xf32>
      %84 = arith.mulf %73, %83 : vector<1x128xf32>
      %85 = arith.addf %82, %84 : vector<1x128xf32>
      %86 = math.tanh %85 : vector<1x128xf32>
      %cst_43 = arith.constant 1.000000e+00 : f32
      %87 = vector.broadcast %cst_43 : f32 to vector<1x128xf32>
      %88 = arith.subf %87, %81 : vector<1x128xf32>
      %89 = arith.mulf %88, %86 : vector<1x128xf32>
      %90 = arith.mulf %81, %arg15 : vector<1x128xf32>
      %91 = arith.addf %89, %90 : vector<1x128xf32>
      %92 = arith.index_cast %arg14 : i32 to index
      %c0_44 = arith.constant 0 : index
      %93 = vector.load %arg13[%92, %c0_44] : memref<16x128xf32, #tpu.memory_space<vmem>>, vector<1x128xf32>
      tpu.vector_store %arg13[%92, %c0_44], %91 {strides = array<i32>} : memref<16x128xf32, #tpu.memory_space<vmem>>, vector<1x128xf32>,
      scf.yield %91 : vector<1x128xf32>
    }
    %c16_i32_34 = arith.constant 16 : i32
    %c0_35 = arith.constant 0 : index
    %c0_36 = arith.constant 0 : index
    %59 = vector.load %arg13[%c0_35, %c0_36] : memref<16x128xf32, #tpu.memory_space<vmem>>, vector<16x128xf32>
    %60 = arith.mulf %42, %59 : vector<16x128xf32>
    %c0_37 = arith.constant 0 : index
    %c0_38 = arith.constant 0 : index
    %61 = vector.load %arg11[%c0_37, %c0_38] : memref<16x128xf32, #tpu.memory_space<vmem>>, vector<16x128xf32>
    tpu.vector_store %arg11[%c0_37, %c0_38], %60 {strides = array<i32>} : memref<16x128xf32, #tpu.memory_space<vmem>>, vector<16x128xf32>,
    return
  }
}

module attributes {stable_mosaic.version = 11 : i64} {
  func.func @gin_stack_kernel(%arg0: i32, %arg1: memref<16x16xbf16, #tpu.memory_space<vmem>>, %arg2: memref<16x128xf32, #tpu.memory_space<vmem>>, %arg3: memref<1x128x128xf32, #tpu.memory_space<vmem>>, %arg4: memref<1x1x128xf32, #tpu.memory_space<vmem>>, %arg5: memref<1x128x128xf32, #tpu.memory_space<vmem>>, %arg6: memref<1x1x128xf32, #tpu.memory_space<vmem>>, %arg7: memref<16x128xf32, #tpu.memory_space<vmem>>, %arg8: memref<16x128xf32, #tpu.memory_space<vmem>>) attributes {dimension_semantics = [#tpu.dimension_semantics<arbitrary>], iteration_bounds = array<i64: 5>, scalar_prefetch = 0 : i64, scratch_operands = 1 : i64, tpu.core_type = #tpu.core_type<tc>, window_params = [{pipeline_mode = #tpu.pipeline_mode<synchronous>, transform_indices = @transform_0, window_bounds = array<i64: 16, 16>}, {pipeline_mode = #tpu.pipeline_mode<synchronous>, transform_indices = @transform_1, window_bounds = array<i64: 16, 128>}, {transform_indices = @transform_2, window_bounds = array<i64: 1, 128, 128>}, {transform_indices = @transform_3, window_bounds = array<i64: 1, 1, 128>}, {transform_indices = @transform_4, window_bounds = array<i64: 1, 128, 128>}, {transform_indices = @transform_5, window_bounds = array<i64: 1, 1, 128>}, {pipeline_mode = #tpu.pipeline_mode<synchronous>, transform_indices = @transform_6, window_bounds = array<i64: 16, 128>}]} {
    %c0_i32 = arith.constant 0 : i32
    %0 = arith.cmpi eq, %arg0, %c0_i32 : i32
    %1 = arith.extui %0 : i1 to i32
    %c0_i32_0 = arith.constant 0 : i32
    %2 = arith.cmpi ne, %1, %c0_i32_0 : i32
    scf.if %2 {
      %c0_23 = arith.constant 0 : index
      %c0_24 = arith.constant 0 : index
      %30 = vector.load %arg2[%c0_23, %c0_24] : memref<16x128xf32, #tpu.memory_space<vmem>>, vector<16x128xf32>
      %c0_25 = arith.constant 0 : index
      %c0_26 = arith.constant 0 : index
      %31 = vector.load %arg8[%c0_25, %c0_26] : memref<16x128xf32, #tpu.memory_space<vmem>>, vector<16x128xf32>
      tpu.vector_store %arg8[%c0_25, %c0_26], %30 {strides = array<i32>} : memref<16x128xf32, #tpu.memory_space<vmem>>, vector<16x128xf32>,
    } else {
    }
    %c0 = arith.constant 0 : index
    %c0_1 = arith.constant 0 : index
    %3 = vector.load %arg8[%c0, %c0_1] : memref<16x128xf32, #tpu.memory_space<vmem>>, vector<16x128xf32>
    %c0_2 = arith.constant 0 : index
    %c0_3 = arith.constant 0 : index
    %4 = vector.load %arg1[%c0_2, %c0_3] : memref<16x16xbf16, #tpu.memory_space<vmem>>, vector<16x16xbf16>
    %5 = arith.truncf %3 : vector<16x128xf32> to vector<16x128xbf16>
    %cst = arith.constant dense<0.000000e+00> : vector<16x128xf32>
    %6 = tpu.matmul %4, %5, %cst {dimension_numbers = #tpu.dot_dimension_numbers<[1], [0], [0], [1], [0, 0, 1, 1], [], []>} : vector<16x16xbf16>, vector<16x128xbf16>, vector<16x128xf32> -> vector<16x128xf32>
    %7 = arith.addf %6, %3 : vector<16x128xf32>
    %c0_4 = arith.constant 0 : index
    %c0_5 = arith.constant 0 : index
    %c0_6 = arith.constant 0 : index
    %8 = vector.load %arg3[%c0_4, %c0_5, %c0_6] : memref<1x128x128xf32, #tpu.memory_space<vmem>>, vector<1x128x128xf32>
    %9 = vector.shape_cast %8 : vector<1x128x128xf32> to vector<128x128xf32>
    %cst_7 = arith.constant dense<0.000000e+00> : vector<16x128xf32>
    %10 = tpu.matmul %7, %9, %cst_7 {dimension_numbers = #tpu.dot_dimension_numbers<[1], [0], [0], [1], [0, 0, 1, 1], [], []>} : vector<16x128xf32>, vector<128x128xf32>, vector<16x128xf32> -> vector<16x128xf32>
    %c0_8 = arith.constant 0 : index
    %c0_9 = arith.constant 0 : index
    %c0_10 = arith.constant 0 : index
    %11 = vector.load %arg4[%c0_8, %c0_9, %c0_10] : memref<1x1x128xf32, #tpu.memory_space<vmem>>, vector<1x1x128xf32>
    %12 = vector.shape_cast %11 : vector<1x1x128xf32> to vector<1x128xf32>
    %13 = vector.broadcast %12 : vector<1x128xf32> to vector<16x128xf32>
    %14 = arith.addf %10, %13 : vector<16x128xf32>
    %cst_11 = arith.constant 0.000000e+00 : f32
    %15 = vector.broadcast %cst_11 : f32 to vector<16x128xf32>
    %16 = arith.maximumf %14, %15 : vector<16x128xf32>
    %c0_12 = arith.constant 0 : index
    %c0_13 = arith.constant 0 : index
    %c0_14 = arith.constant 0 : index
    %17 = vector.load %arg5[%c0_12, %c0_13, %c0_14] : memref<1x128x128xf32, #tpu.memory_space<vmem>>, vector<1x128x128xf32>
    %18 = vector.shape_cast %17 : vector<1x128x128xf32> to vector<128x128xf32>
    %cst_15 = arith.constant dense<0.000000e+00> : vector<16x128xf32>
    %19 = tpu.matmul %16, %18, %cst_15 {dimension_numbers = #tpu.dot_dimension_numbers<[1], [0], [0], [1], [0, 0, 1, 1], [], []>} : vector<16x128xf32>, vector<128x128xf32>, vector<16x128xf32> -> vector<16x128xf32>
    %c0_16 = arith.constant 0 : index
    %c0_17 = arith.constant 0 : index
    %c0_18 = arith.constant 0 : index
    %20 = vector.load %arg6[%c0_16, %c0_17, %c0_18] : memref<1x1x128xf32, #tpu.memory_space<vmem>>, vector<1x1x128xf32>
    %21 = vector.shape_cast %20 : vector<1x1x128xf32> to vector<1x128xf32>
    %22 = vector.broadcast %21 : vector<1x128xf32> to vector<16x128xf32>
    %23 = arith.addf %19, %22 : vector<16x128xf32>
    %cst_19 = arith.constant 0.000000e+00 : f32
    %24 = vector.broadcast %cst_19 : f32 to vector<16x128xf32>
    %25 = arith.maximumf %23, %24 : vector<16x128xf32>
    %c0_20 = arith.constant 0 : index
    %c0_21 = arith.constant 0 : index
    %26 = vector.load %arg8[%c0_20, %c0_21] : memref<16x128xf32, #tpu.memory_space<vmem>>, vector<16x128xf32>
    tpu.vector_store %arg8[%c0_20, %c0_21], %25 {strides = array<i32>} : memref<16x128xf32, #tpu.memory_space<vmem>>, vector<16x128xf32>,
    %c4_i32 = arith.constant 4 : i32
    %27 = arith.cmpi eq, %arg0, %c4_i32 : i32
    %28 = arith.extui %27 : i1 to i32
    %c0_i32_22 = arith.constant 0 : i32
    %29 = arith.cmpi ne, %28, %c0_i32_22 : i32
    scf.if %29 {
      %c0_23 = arith.constant 0 : index
      %c0_24 = arith.constant 0 : index
      %30 = vector.load %arg7[%c0_23, %c0_24] : memref<16x128xf32, #tpu.memory_space<vmem>>, vector<16x128xf32>
      tpu.vector_store %arg7[%c0_23, %c0_24], %25 {strides = array<i32>} : memref<16x128xf32, #tpu.memory_space<vmem>>, vector<16x128xf32>,
    } else {
    }
    return
  }
  func.func @transform_0(%arg0: i32) -> (i32, i32) {
    %c0_i32 = arith.constant 0 : i32
    %c0_i32_0 = arith.constant 0 : i32
    %c0_i32_1 = arith.constant 0 : i32
    return %c0_i32, %c0_i32_0 : i32, i32
  }
  func.func @transform_1(%arg0: i32) -> (i32, i32) {
    %c0_i32 = arith.constant 0 : i32
    %c0_i32_0 = arith.constant 0 : i32
    %c0_i32_1 = arith.constant 0 : i32
    return %c0_i32, %c0_i32_0 : i32, i32
  }
  func.func @transform_2(%arg0: i32) -> (i32, i32, i32) {
    %c0_i32 = arith.constant 0 : i32
    %c0_i32_0 = arith.constant 0 : i32
    %c0_i32_1 = arith.constant 0 : i32
    return %arg0, %c0_i32, %c0_i32_0 : i32, i32, i32
  }
  func.func @transform_3(%arg0: i32) -> (i32, i32, i32) {
    %c0_i32 = arith.constant 0 : i32
    %c0_i32_0 = arith.constant 0 : i32
    %c0_i32_1 = arith.constant 0 : i32
    return %arg0, %c0_i32, %c0_i32_0 : i32, i32, i32
  }
  func.func @transform_4(%arg0: i32) -> (i32, i32, i32) {
    %c0_i32 = arith.constant 0 : i32
    %c0_i32_0 = arith.constant 0 : i32
    %c0_i32_1 = arith.constant 0 : i32
    return %arg0, %c0_i32, %c0_i32_0 : i32, i32, i32
  }
  func.func @transform_5(%arg0: i32) -> (i32, i32, i32) {
    %c0_i32 = arith.constant 0 : i32
    %c0_i32_0 = arith.constant 0 : i32
    %c0_i32_1 = arith.constant 0 : i32
    return %arg0, %c0_i32, %c0_i32_0 : i32, i32, i32
  }
  func.func @transform_6(%arg0: i32) -> (i32, i32) {
    %c0_i32 = arith.constant 0 : i32
    %c0_i32_0 = arith.constant 0 : i32
    %c0_i32_1 = arith.constant 0 : i32
    return %c0_i32, %c0_i32_0 : i32, i32
  }
}

module attributes {stable_mosaic.version = 11 : i64} {
  func.func @head_kernel(%arg0: memref<16x128xf32, #tpu.memory_space<vmem>>, %arg1: memref<16x128xf32, #tpu.memory_space<vmem>>, %arg2: memref<128x128xf32, #tpu.memory_space<vmem>>, %arg3: memref<1x128xf32, #tpu.memory_space<vmem>>, %arg4: memref<128x128xf32, #tpu.memory_space<vmem>>, %arg5: memref<1x128xf32, #tpu.memory_space<vmem>>, %arg6: memref<16x128xf32, #tpu.memory_space<vmem>>) attributes {dimension_semantics = [], scalar_prefetch = 0 : i64, scratch_operands = 0 : i64, tpu.core_type = #tpu.core_type<tc>} {
    %c0 = arith.constant 0 : index
    %c0_0 = arith.constant 0 : index
    %0 = vector.load %arg0[%c0, %c0_0] : memref<16x128xf32, #tpu.memory_space<vmem>>, vector<16x128xf32>
    %c0_1 = arith.constant 0 : index
    %c0_2 = arith.constant 0 : index
    %1 = vector.load %arg1[%c0_1, %c0_2] : memref<16x128xf32, #tpu.memory_space<vmem>>, vector<16x128xf32>
    %2 = arith.mulf %0, %1 : vector<16x128xf32>
    %c0_3 = arith.constant 0 : index
    %c0_4 = arith.constant 0 : index
    %3 = vector.load %arg2[%c0_3, %c0_4] : memref<128x128xf32, #tpu.memory_space<vmem>>, vector<128x128xf32>
    %cst = arith.constant dense<0.000000e+00> : vector<16x128xf32>
    %4 = tpu.matmul %2, %3, %cst {dimension_numbers = #tpu.dot_dimension_numbers<[1], [0], [0], [1], [0, 0, 1, 1], [], []>} : vector<16x128xf32>, vector<128x128xf32>, vector<16x128xf32> -> vector<16x128xf32>
    %c0_5 = arith.constant 0 : index
    %c0_6 = arith.constant 0 : index
    %5 = vector.load %arg3[%c0_5, %c0_6] : memref<1x128xf32, #tpu.memory_space<vmem>>, vector<1x128xf32>
    %6 = vector.broadcast %5 : vector<1x128xf32> to vector<16x128xf32>
    %7 = arith.addf %4, %6 : vector<16x128xf32>
    %cst_7 = arith.constant 0.000000e+00 : f32
    %8 = vector.broadcast %cst_7 : f32 to vector<16x128xf32>
    %9 = arith.maximumf %7, %8 : vector<16x128xf32>
    %c0_8 = arith.constant 0 : index
    %c0_9 = arith.constant 0 : index
    %10 = vector.load %arg4[%c0_8, %c0_9] : memref<128x128xf32, #tpu.memory_space<vmem>>, vector<128x128xf32>
    %cst_10 = arith.constant dense<0.000000e+00> : vector<16x128xf32>
    %11 = tpu.matmul %9, %10, %cst_10 {dimension_numbers = #tpu.dot_dimension_numbers<[1], [0], [0], [1], [0, 0, 1, 1], [], []>} : vector<16x128xf32>, vector<128x128xf32>, vector<16x128xf32> -> vector<16x128xf32>
    %c0_11 = arith.constant 0 : index
    %c0_12 = arith.constant 0 : index
    %12 = vector.load %arg5[%c0_11, %c0_12] : memref<1x128xf32, #tpu.memory_space<vmem>>, vector<1x128xf32>
    %13 = vector.broadcast %12 : vector<1x128xf32> to vector<16x128xf32>
    %14 = arith.addf %11, %13 : vector<16x128xf32>
    %cst_13 = arith.constant dense<0xFF800000> : vector<16xf32>
    %15 = vector.multi_reduction <maximumf>, %14, %cst_13 [1] : vector<16x128xf32> to vector<16xf32>
    %16 = vector.shape_cast %15 : vector<16xf32> to vector<16x1xf32>
    %17 = vector.broadcast %16 : vector<16x1xf32> to vector<16x128xf32>
    %18 = arith.subf %14, %17 : vector<16x128xf32>
    %19 = math.exp %18 : vector<16x128xf32>
    %cst_14 = arith.constant dense<0.000000e+00> : vector<16xf32>
    %20 = vector.multi_reduction <add>, %19, %cst_14 [1] : vector<16x128xf32> to vector<16xf32>
    %21 = vector.shape_cast %20 : vector<16xf32> to vector<16x1xf32>
    %22 = math.log %21 : vector<16x1xf32>
    %23 = arith.addf %22, %16 : vector<16x1xf32>
    %24 = vector.broadcast %23 : vector<16x1xf32> to vector<16x128xf32>
    %25 = arith.subf %14, %24 : vector<16x128xf32>
    %c0_15 = arith.constant 0 : index
    %c0_16 = arith.constant 0 : index
    %26 = vector.load %arg6[%c0_15, %c0_16] : memref<16x128xf32, #tpu.memory_space<vmem>>, vector<16x128xf32>
    tpu.vector_store %arg6[%c0_15, %c0_16], %25 {strides = array<i32>} : memref<16x128xf32, #tpu.memory_space<vmem>>, vector<16x128xf32>,
    return
  }
}

</mosaic_0001>

<llo_original>
// kernel: imbgnn_forward.4
$region0: #{imbgnn_forward.4}
  #allocation0 [shape = 'u32[]', space=smem, size = 0x4, offset = 0x4, fixed_abs, tag = 'smem constant byte address 0x4 - core index']
  #allocation1 [shape = 'u32[144,128]{1,0:T(1,128)}', space=vmem, size = 0x12000, scoped, tag = 'internal scratch']
  #allocation2 [shape = 'f32[16,128]{1,0:T(8,128)}', space=vmem, size = 0x2000, scoped, tag = 'scratch operand']
  %s0 = inlined_call_operand.vmem [shape: bf16[16,16], index: 0, kind: input, shape index: {}]
  %s1 = inlined_call_operand.vmem [shape: f32[16,128], index: 1, kind: input, shape index: {}]
  %s2 = inlined_call_operand.vmem [shape: f32[5,128,128], index: 2, kind: input, shape index: {}]
  %s3 = inlined_call_operand.vmem [shape: f32[5,1,128], index: 3, kind: input, shape index: {}]
  %s4 = inlined_call_operand.vmem [shape: f32[5,128,128], index: 4, kind: input, shape index: {}]
  %s5 = inlined_call_operand.vmem [shape: f32[5,1,128], index: 5, kind: input, shape index: {}]
  %s6 = inlined_call_operand.vmem [shape: f32[16,128], index: 6, kind: output, shape index: {}]
  %s7 = sld [smem:[#allocation0]]
  $region65: #{imbgnn_forward.4} parent=0
    _
  %s9 = ssub.s32 1, %s7
  %s10 = scalar_select 0, %s9, %s7
  loop: start=0, step=1, limit=7
  $region2: #{imbgnn_forward.4} parent=0 // loop_pre_header
    _
  $region3: #{imbgnn_forward.4} parent=0 // loop_header
    %s12 = sphi 0, %s16
    %p13 = scmp.ge.s32.totalorder %s12, 7
    %s20 = sphi 0, %s20
    %s22 = sphi 0, %s20
    %s23 = sphi 0, %s22
    %s37 = sphi 0, %s23
    %s41 = sphi 0, %s41
    %s43 = sphi 0, %s41
    %s44 = sphi 0, %s43
    %s58 = sphi 0, %s44
    %s64 = sphi 0, %s66
    %s67 = sphi 0, %s64
    %s68 = sphi 0, %s67
    %s84 = sphi 0, %s68
    %s90 = sphi 0, %s92
    %s93 = sphi 0, %s90
    %s94 = sphi 0, %s93
    %s110 = sphi 0, %s94
    %s116 = sphi 0, %s118
    %s119 = sphi 0, %s116
    %s120 = sphi 0, %s119
    %s136 = sphi 0, %s120
    %s142 = sphi 0, %s144
    %s145 = sphi 0, %s142
    %s146 = sphi 0, %s145
    %s162 = sphi 0, %s146
    %s166 = sphi 0, %s166
    %s168 = sphi 0, %s166
    %s169 = sphi 0, %s168
    %s183 = sphi 0, %s169
  $region4: #{imbgnn_forward.4} parent=0 // loop_header_branch
    %15 = sbr.rel (%p13) target = $region8
  $region5: #{imbgnn_forward.4} parent=0 // loop_body
    %s17 = ssub.s32 %s12, 1
    %s18 = ssub.s32 %s12, 2
    %s19 = sadd.s32 %s12, 1
    %s21 = sadd.s32 %s20, 1
    %p24 = scmp.eq.s32.totalorder %s12, 4
    %p25 = scmp.ne.s32.totalorder %s20, %s22
    %p26 = scmp.eq.s32.totalorder %s12, 0
    %p27 = por %p25, %p26
    %p28 = scmp.ne.s32.totalorder %s20, %s22
    %p29 = scmp.eq.s32.totalorder %s17, 4
    %p30 = por %p28, %p29
    %p31 = scmp.ne.s32.totalorder %s22, %s23
    %p32 = scmp.eq.s32.totalorder %s17, 0
    %p33 = por %p31, %p32
    %p34 = scmp.ne.s32.totalorder %s22, %s23
    %p35 = scmp.eq.s32.totalorder %s18, 4
    %p36 = por %p34, %p35
    %p38 = scmp.ne.s32.totalorder %s23, %s37
    %p39 = scmp.eq.s32.totalorder %s18, 0
    %p40 = por %p38, %p39
    %s42 = sadd.s32 %s41, 1
    %p45 = scmp.eq.s32.totalorder %s12, 4
    %p46 = scmp.ne.s32.totalorder %s41, %s43
    %p47 = scmp.eq.s32.totalorder %s12, 0
    %p48 = por %p46, %p47
    %p49 = scmp.ne.s32.totalorder %s41, %s43
    %p50 = scmp.eq.s32.totalorder %s17, 4
    %p51 = por %p49, %p50
    %p52 = scmp.ne.s32.totalorder %s43, %s44
    %p53 = scmp.eq.s32.totalorder %s17, 0
    %p54 = por %p52, %p53
    %p55 = scmp.ne.s32.totalorder %s43, %s44
    %p56 = scmp.eq.s32.totalorder %s18, 4
    %p57 = por %p55, %p56
    %p59 = scmp.ne.s32.totalorder %s44, %s58
    %p60 = scmp.eq.s32.totalorder %s18, 0
    %p61 = por %p59, %p60
    %s62 = ssub.s32 %s12, %s19
    %p63 = scmp.eq.s32.totalorder %s62, 0
    %s65 = sadd.s32 %s64, 1
    %s66 = scalar_select %p63, %s64, %s65
    %p69 = pneg %p63
    %p70 = scmp.eq.s32.totalorder %s12, 4
    %p71 = por %p69, %p70
    %p72 = scmp.ne.s32.totalorder %s64, %s67
    %p73 = scmp.eq.s32.totalorder %s12, 0
    %p74 = por %p72, %p73
    %p75 = scmp.ne.s32.totalorder %s64, %s67
    %p76 = scmp.eq.s32.totalorder %s17, 4
    %p77 = por %p75, %p76
    %p78 = scmp.ne.s32.totalorder %s67, %s68
    %p79 = scmp.eq.s32.totalorder %s17, 0
    %p80 = por %p78, %p79
    %p81 = scmp.ne.s32.totalorder %s67, %s68
    %p82 = scmp.eq.s32.totalorder %s18, 4
    %p83 = por %p81, %p82
    %p85 = scmp.ne.s32.totalorder %s68, %s84
    %p86 = scmp.eq.s32.totalorder %s18, 0
    %p87 = por %p85, %p86
    %s88 = ssub.s32 %s12, %s19
    %p89 = scmp.eq.s32.totalorder %s88, 0
    %s91 = sadd.s32 %s90, 1
    %s92 = scalar_select %p89, %s90, %s91
    %p95 = pneg %p89
    %p96 = scmp.eq.s32.totalorder %s12, 4
    %p97 = por %p95, %p96
    %p98 = scmp.ne.s32.totalorder %s90, %s93
    %p99 = scmp.eq.s32.totalorder %s12, 0
    %p100 = por %p98, %p99
    %p101 = scmp.ne.s32.totalorder %s90, %s93
    %p102 = scmp.eq.s32.totalorder %s17, 4
    %p103 = por %p101, %p102
    %p104 = scmp.ne.s32.totalorder %s93, %s94
    %p105 = scmp.eq.s32.totalorder %s17, 0
    %p106 = por %p104, %p105
    %p107 = scmp.ne.s32.totalorder %s93, %s94
    %p108 = scmp.eq.s32.totalorder %s18, 4
    %p109 = por %p107, %p108
    %p111 = scmp.ne.s32.totalorder %s94, %s110
    %p112 = scmp.eq.s32.totalorder %s18, 0
    %p113 = por %p111, %p112
    %s114 = ssub.s32 %s12, %s19
    %p115 = scmp.eq.s32.totalorder %s114, 0
    %s117 = sadd.s32 %s116, 1
    %s118 = scalar_select %p115, %s116, %s117
    %p121 = pneg %p115
    %p122 = scmp.eq.s32.totalorder %s12, 4
    %p123 = por %p121, %p122
    %p124 = scmp.ne.s32.totalorder %s116, %s119
    %p125 = scmp.eq.s32.totalorder %s12, 0
    %p126 = por %p124, %p125
    %p127 = scmp.ne.s32.totalorder %s116, %s119
    %p128 = scmp.eq.s32.totalorder %s17, 4
    %p129 = por %p127, %p128
    %p130 = scmp.ne.s32.totalorder %s119, %s120
    %p131 = scmp.eq.s32.totalorder %s17, 0
    %p132 = por %p130, %p131
    %p133 = scmp.ne.s32.totalorder %s119, %s120
    %p134 = scmp.eq.s32.totalorder %s18, 4
    %p135 = por %p133, %p134
    %p137 = scmp.ne.s32.totalorder %s120, %s136
    %p138 = scmp.eq.s32.totalorder %s18, 0
    %p139 = por %p137, %p138
    %s140 = ssub.s32 %s12, %s19
    %p141 = scmp.eq.s32.totalorder %s140, 0
    %s143 = sadd.s32 %s142, 1
    %s144 = scalar_select %p141, %s142, %s143
    %p147 = pneg %p141
    %p148 = scmp.eq.s32.totalorder %s12, 4
    %p149 = por %p147, %p148
    %p150 = scmp.ne.s32.totalorder %s142, %s145
    %p151 = scmp.eq.s32.totalorder %s12, 0
    %p152 = por %p150, %p151
    %p153 = scmp.ne.s32.totalorder %s142, %s145
    %p154 = scmp.eq.s32.totalorder %s17, 4
    %p155 = por %p153, %p154
    %p156 = scmp.ne.s32.totalorder %s145, %s146
    %p157 = scmp.eq.s32.totalorder %s17, 0
    %p158 = por %p156, %p157
    %p159 = scmp.ne.s32.totalorder %s145, %s146
    %p160 = scmp.eq.s32.totalorder %s18, 4
    %p161 = por %p159, %p160
    %p163 = scmp.ne.s32.totalorder %s146, %s162
    %p164 = scmp.eq.s32.totalorder %s18, 0
    %p165 = por %p163, %p164
    %s167 = sadd.s32 %s166, 1
    %p170 = scmp.eq.s32.totalorder %s12, 4
    %p171 = scmp.ne.s32.totalorder %s166, %s168
    %p172 = scmp.eq.s32.totalorder %s12, 0
    %p173 = por %p171, %p172
    %p174 = scmp.ne.s32.totalorder %s166, %s168
    %p175 = scmp.eq.s32.totalorder %s17, 4
    %p176 = por %p174, %p175
    %p177 = scmp.ne.s32.totalorder %s168, %s169
    %p178 = scmp.eq.s32.totalorder %s17, 0
    %p179 = por %p177, %p178
    %p180 = scmp.ne.s32.totalorder %s168, %s169
    %p181 = scmp.eq.s32.totalorder %s18, 4
    %p182 = por %p180, %p181
    %p184 = scmp.ne.s32.totalorder %s169, %s183
    %p185 = scmp.eq.s32.totalorder %s18, 0
    %p186 = por %p184, %p185
    %p187 = scmp.le.s32.totalorder 1, %s12
    %p188 = scmp.lt.s32.totalorder %s12, 6
    %p189 = pnand %p187, %p188
    %p190 = pneg %p189
    // Predicated region
    $region9: #{imbgnn_forward.4} parent=5 // pred_check
      _
    $region10: #{imbgnn_forward.4} parent=5 // pred_check_branch
      %192 = sbr.rel (%p189) target = $region12
    $region11: #{imbgnn_forward.4} parent=5 // pred_region
      %s193 = ssub.s32 %s12, 1
      // Predicated region
      $region13: #{imbgnn_forward.4} parent=11 // pred_check
        %p194 = pneg %p33
      $region14: #{imbgnn_forward.4} parent=11 // pred_check_branch
        %196 = sbr.rel (%p194) target = $region16
      $region15: #{imbgnn_forward.4} parent=11 // pred_region
        _
      $region16: #{imbgnn_forward.4} parent=11 // pred_fallthru
        _
      // Predicated region
      $region17: #{imbgnn_forward.4} parent=11 // pred_check
        %p197 = pneg %p54
      $region18: #{imbgnn_forward.4} parent=11 // pred_check_branch
        %199 = sbr.rel (%p197) target = $region20
      $region19: #{imbgnn_forward.4} parent=11 // pred_region
        _
      $region20: #{imbgnn_forward.4} parent=11 // pred_fallthru
        _
    $region12: #{imbgnn_forward.4} parent=5 // pred_fallthru
      _
    %p200 = scmp.lt.s32.totalorder %s12, 5
    // Predicated region
    $region21: #{imbgnn_forward.4} parent=5 // pred_check
      %p201 = pneg %p200
    $region22: #{imbgnn_forward.4} parent=5 // pred_check_branch
      %203 = sbr.rel (%p201) target = $region24
    $region23: #{imbgnn_forward.4} parent=5 // pred_region
      // Predicated region
      $region25: #{imbgnn_forward.4} parent=23 // pred_check
        %p204 = pneg %p74
      $region26: #{imbgnn_forward.4} parent=23 // pred_check_branch
        %206 = sbr.rel (%p204) target = $region28
      $region27: #{imbgnn_forward.4} parent=23 // pred_region
        %p207 = scmp.lt.s32.totalorder %s12, 4
        %s208 = scalar_select %p207, %s12, 4
        %s209 = smul.addr %s208, 16
        %s210 = smul.addr %s209, 8
        %s211 = scalar_lea.vmem %s2, %s210
      $region28: #{imbgnn_forward.4} parent=23 // pred_fallthru
        _
      // Predicated region
      $region29: #{imbgnn_forward.4} parent=23 // pred_check
        %p212 = pneg %p100
      $region30: #{imbgnn_forward.4} parent=23 // pred_check_branch
        %214 = sbr.rel (%p212) target = $region32
      $region31: #{imbgnn_forward.4} parent=23 // pred_region
        %p215 = scmp.lt.s32.totalorder %s12, 4
        %s216 = scalar_select %p215, %s12, 4
        %s217 = scalar_lea.vmem %s3, %s216
      $region32: #{imbgnn_forward.4} parent=23 // pred_fallthru
        _
      // Predicated region
      $region33: #{imbgnn_forward.4} parent=23 // pred_check
        %p218 = pneg %p126
      $region34: #{imbgnn_forward.4} parent=23 // pred_check_branch
        %220 = sbr.rel (%p218) target = $region36
      $region35: #{imbgnn_forward.4} parent=23 // pred_region
        %p221 = scmp.lt.s32.totalorder %s12, 4
        %s222 = scalar_select %p221, %s12, 4
        %s223 = smul.addr %s222, 16
        %s224 = smul.addr %s223, 8
        %s225 = scalar_lea.vmem %s4, %s224
      $region36: #{imbgnn_forward.4} parent=23 // pred_fallthru
        _
      // Predicated region
      $region37: #{imbgnn_forward.4} parent=23 // pred_check
        %p226 = pneg %p152
      $region38: #{imbgnn_forward.4} parent=23 // pred_check_branch
        %228 = sbr.rel (%p226) target = $region40
      $region39: #{imbgnn_forward.4} parent=23 // pred_region
        %p229 = scmp.lt.s32.totalorder %s12, 4
        %s230 = scalar_select %p229, %s12, 4
        %s231 = scalar_lea.vmem %s5, %s230
      $region40: #{imbgnn_forward.4} parent=23 // pred_fallthru
        _
    $region24: #{imbgnn_forward.4} parent=5 // pred_fallthru
      _
    %p232 = scmp.le.s32.totalorder 1, %s12
    %p233 = scmp.lt.s32.totalorder %s12, 6
    %p234 = pnand %p232, %p233
    %p235 = pneg %p234
    // Predicated region
    $region41: #{imbgnn_forward.4} parent=5 // pred_check
      _
    $region42: #{imbgnn_forward.4} parent=5 // pred_check_branch
      %237 = sbr.rel (%p234) target = $region44
    $region43: #{imbgnn_forward.4} parent=5 // pred_region
      %s238 = ssub.s32 %s12, 1
      %p239 = pneg %p33
      %p240 = pneg %p30
      %p241 = pneg %p54
      %p242 = pneg %p51
      %p243 = scmp.lt.s32.totalorder %s17, 4
      %s244 = scalar_select %p243, %s17, 4
      %s245 = smul.addr %s244, 16
      %s246 = smul.addr %s245, 8
      %s247 = scalar_lea.vmem %s2, %s246
      %p248 = pneg %p80
      %p249 = pneg %p77
      %p250 = scmp.lt.s32.totalorder %s17, 4
      %s251 = scalar_select %p250, %s17, 4
      %s252 = scalar_lea.vmem %s3, %s251
      %p253 = pneg %p106
      %p254 = pneg %p103
      %p255 = scmp.lt.s32.totalorder %s17, 4
      %s256 = scalar_select %p255, %s17, 4
      %s257 = smul.addr %s256, 16
      %s258 = smul.addr %s257, 8
      %s259 = scalar_lea.vmem %s4, %s258
      %p260 = pneg %p132
      %p261 = pneg %p129
      %p262 = scmp.lt.s32.totalorder %s17, 4
      %s263 = scalar_select %p262, %s17, 4
      %s264 = scalar_lea.vmem %s5, %s263
      %p265 = pneg %p158
      %p266 = pneg %p155
      %p267 = pneg %p179
      %p268 = pneg %p176
      %p269 = scmp.lt.s32.totalorder %s17, 4
      %s270 = scalar_select %p269, %s17, 4
      %s271 = smul.addr %s270, 16
      %s272 = smul.addr %s271, 8
      %s273 = scalar_lea.vmem %s2, %s272
      %p274 = scmp.lt.s32.totalorder %s17, 4
      %s275 = scalar_select %p274, %s17, 4
      %s276 = scalar_lea.vmem %s3, %s275
      %p277 = scmp.lt.s32.totalorder %s17, 4
      %s278 = scalar_select %p277, %s17, 4
      %s279 = smul.addr %s278, 16
      %s280 = smul.addr %s279, 8
      %s281 = scalar_lea.vmem %s4, %s280
      %p282 = scmp.lt.s32.totalorder %s17, 4
      %s283 = scalar_select %p282, %s17, 4
      %s284 = scalar_lea.vmem %s5, %s283
      %p286 = scmp.eq.s32.totalorder %s17, 0
      // Predicated region
      $region45: #{imbgnn_forward.4} parent=43 // pred_check
        %p287 = pneg %p286
      $region46: #{imbgnn_forward.4} parent=43 // pred_check_branch
        %289 = sbr.rel (%p287) target = $region48
      $region47: #{imbgnn_forward.4} parent=43 // pred_region
        %v290 = vld [vmem:[%s1] sm:$0xff]
        %v291 = vld [vmem:[%s1 + $0x8] sm:$0xff]
        %292 = vst [vmem:[#allocation2] sm:$0xff] %v290
        %293 = vst [vmem:[#allocation2 + $0x8] sm:$0xff] %v291
      $region48: #{imbgnn_forward.4} parent=43 // pred_fallthru
        _
      %v294 = vld [vmem:[#allocation2] sm:$0xff]
      %v295 = vld [vmem:[#allocation2 + $0x8] sm:$0xff]
      %v296 = vld [vmem:[%s0] sm:$0xf]
      %v297 = vld [vmem:[%s0 + $0x4] sm:$0xf]
      %v298 = vpack.c.bf16 %v295, %v294
      %v301 = vunpack.c.l.b16 %v296
      %v302 = vunpack.c.l.b16 %v297
      %v303 = vpack.c.b16 %v302, %v301
      %vm304 = vcmask 130048
      %v306 = vsel %vm304, %v303, 0
      %308 = vmatprep.subr.bf16.mxu0 0
      %309 = vmatpush1.bf16.msra.mxu0 0
      %310 = vmatprep.subr.bf16.mxu0 0
      %311 = vmatpush1.bf16.msra.mxu0 0
      %312 = vmatprep.subr.bf16.mxu0 0
      %313 = vmatpush1.bf16.msra.mxu0 0
      %314 = vmatprep.subr.bf16.mxu0 0
      %315 = vmatpush1.bf16.msra.mxu0 0
      %316 = vmatprep.subr.bf16.mxu0 0
      %317 = vmatpush1.bf16.msra.mxu0 0
      %318 = vmatprep.subr.bf16.mxu0 0
      %319 = vmatpush1.bf16.msra.mxu0 0
      %320 = vmatprep.subr.bf16.mxu0 0
      %321 = vmatpush1.bf16.msra.mxu0 0
      %322 = vmatprep.subr.bf16.mxu0 0
      %323 = vmatpush1.bf16.msra.mxu0 %v298
      %324 = vmatprep.subr.bf16.mxu0 0
      %325 = vmatpush2.bf16.msra.mxu0 0
      %326 = vmatprep.subr.bf16.mxu0 0
      %327 = vmatpush2.bf16.msra.mxu0 0
      %328 = vmatprep.subr.bf16.mxu0 0
      %329 = vmatpush2.bf16.msra.mxu0 0
      %330 = vmatprep.subr.bf16.mxu0 0
      %331 = vmatpush2.bf16.msra.mxu0 0
      %332 = vmatprep.subr.bf16.mxu0 0
      %333 = vmatpush2.bf16.msra.mxu0 0
      %334 = vmatprep.subr.bf16.mxu0 0
      %335 = vmatpush2.bf16.msra.mxu0 0
      %336 = vmatprep.subr.bf16.mxu0 0
      %337 = vmatpush2.bf16.msra.mxu0 0
      %338 = vmatprep.subr.bf16.mxu0 0
      %339 = vmatpush2.bf16.msra.mxu0 0
      %340 = vmatprep.mubr.bf16.mxu0 0
      %341 = vmatmul.mubr.bf16.gmra.mxu0 %v306
      %v342 = vpop.f32.mrf.mxu0
      %v343 = vadd.f32 %v294, %v342
      %v344 = vpop.f32.mrf.mxu0
      %v345 = vpop.f32.mrf.mxu0
      %v346 = vadd.f32 %v295, %v345
      %v347 = vpop.f32.mrf.mxu0
      %348 = vdwg.mxu0
      %v349 = vld [vmem:[%s273] sm:$0xff]
      %v350 = vld [vmem:[%s273 + $0x8] sm:$0xff]
      %v351 = vld [vmem:[%s273 + $0x10] sm:$0xff]
      %v352 = vld [vmem:[%s273 + $0x18] sm:$0xff]
      %v353 = vld [vmem:[%s273 + $0x20] sm:$0xff]
      %v354 = vld [vmem:[%s273 + $0x28] sm:$0xff]
      %v355 = vld [vmem:[%s273 + $0x30] sm:$0xff]
      %v356 = vld [vmem:[%s273 + $0x38] sm:$0xff]
      %v357 = vld [vmem:[%s273 + $0x40] sm:$0xff]
      %v358 = vld [vmem:[%s273 + $0x48] sm:$0xff]
      %v359 = vld [vmem:[%s273 + $0x50] sm:$0xff]
      %v360 = vld [vmem:[%s273 + $0x58] sm:$0xff]
      %v361 = vld [vmem:[%s273 + $0x60] sm:$0xff]
      %v362 = vld [vmem:[%s273 + $0x68] sm:$0xff]
      %v363 = vld [vmem:[%s273 + $0x70] sm:$0xff]
      %v364 = vld [vmem:[%s273 + $0x78] sm:$0xff]
      %v365 = vld [vmem:[%s276] sm:$0x1]
      %v367 = vlaneseq
      %v368 = vshrl.u32 %v367, 7
      %v369 = vsub.s32 0, %v368
      %v370 = vrot.slane %v365, %v369
      %372 = vmatprep.subr.mxu0 0.0
      %373 = vmatpush1.msra.mxu0 %v364
      %374 = vmatprep.subr.mxu0 0.0
      %375 = vmatpush1.msra.mxu0 %v363
      %376 = vmatprep.subr.mxu0 0.0
      %377 = vmatpush1.msra.mxu0 %v362
      %378 = vmatprep.subr.mxu0 0.0
      %379 = vmatpush1.msra.mxu0 %v361
      %380 = vmatprep.subr.mxu0 0.0
      %381 = vmatpush1.msra.mxu0 %v360
      %382 = vmatprep.subr.mxu0 0.0
      %383 = vmatpush1.msra.mxu0 %v359
      %384 = vmatprep.subr.mxu0 0.0
      %385 = vmatpush1.msra.mxu0 %v358
      %386 = vmatprep.subr.mxu0 0.0
      %387 = vmatpush1.msra.mxu0 %v357
      %388 = vmatprep.subr.mxu0 0.0
      %389 = vmatpush1.msra.mxu0 %v356
      %390 = vmatprep.subr.mxu0 0.0
      %391 = vmatpush1.msra.mxu0 %v355
      %392 = vmatprep.subr.mxu0 0.0
      %393 = vmatpush1.msra.mxu0 %v354
      %394 = vmatprep.subr.mxu0 0.0
      %395 = vmatpush1.msra.mxu0 %v353
      %396 = vmatprep.subr.mxu0 0.0
      %397 = vmatpush1.msra.mxu0 %v352
      %398 = vmatprep.subr.mxu0 0.0
      %399 = vmatpush1.msra.mxu0 %v351
      %400 = vmatprep.subr.mxu0 0.0
      %401 = vmatpush1.msra.mxu0 %v350
      %402 = vmatprep.subr.mxu0 0.0
      %403 = vmatpush1.msra.mxu0 %v349
      %404 = vmatprep.subr.mxu0 0.0
      %405 = vmatpush2.msra.mxu0 0.0
      %406 = vmatprep.subr.mxu0 0.0
      %407 = vmatpush2.msra.mxu0 0.0
      %408 = vmatprep.subr.mxu0 0.0
      %409 = vmatpush2.msra.mxu0 0.0
      %410 = vmatprep.subr.mxu0 0.0
      %411 = vmatpush2.msra.mxu0 0.0
      %412 = vmatprep.subr.mxu0 0.0
      %413 = vmatpush2.msra.mxu0 0.0
      %414 = vmatprep.subr.mxu0 0.0
      %415 = vmatpush2.msra.mxu0 0.0
      %416 = vmatprep.subr.mxu0 0.0
      %417 = vmatpush2.msra.mxu0 0.0
      %418 = vmatprep.subr.mxu0 0.0
      %419 = vmatpush2.msra.mxu0 0.0
      %420 = vmatprep.subr.mxu0 0.0
      %421 = vmatpush2.msra.mxu0 0.0
      %422 = vmatprep.subr.mxu0 0.0
      %423 = vmatpush2.msra.mxu0 0.0
      %424 = vmatprep.subr.mxu0 0.0
      %425 = vmatpush2.msra.mxu0 0.0
      %426 = vmatprep.subr.mxu0 0.0
      %427 = vmatpush2.msra.mxu0 0.0
      %428 = vmatprep.subr.mxu0 0.0
      %429 = vmatpush2.msra.mxu0 0.0
      %430 = vmatprep.subr.mxu0 0.0
      %431 = vmatpush2.msra.mxu0 0.0
      %432 = vmatprep.subr.mxu0 0.0
      %433 = vmatpush2.msra.mxu0 0.0
      %434 = vmatprep.subr.mxu0 0.0
      %435 = vmatpush2.msra.mxu0 0.0
      %436 = vmatprep.mubr.f32.mxu0 0.0
      %437 = vmatmul.mubr.f32.gmra.mxu0 %v343
      %v438 = vpop.f32.mrf.mxu0
      %v439 = vadd.f32 %v370, %v438
      %v440 = vpop.f32.mrf.mxu0
      %441 = vmatprep.mubr.f32.mxu0 0.0
      %442 = vmatmul.mubr.f32.gmra.mxu0 %v346
      %v443 = vpop.f32.mrf.mxu0
      %v444 = vadd.f32 %v370, %v443
      %v445 = vpop.f32.mrf.mxu0
      %446 = vdwg.mxu0
      %v447 = vmax.f32 %v439, 0.0
      %v448 = vmax.f32 %v444, 0.0
      %v449 = vld [vmem:[%s281] sm:$0xff]
      %v450 = vld [vmem:[%s281 + $0x8] sm:$0xff]
      %v451 = vld [vmem:[%s281 + $0x10] sm:$0xff]
      %v452 = vld [vmem:[%s281 + $0x18] sm:$0xff]
      %v453 = vld [vmem:[%s281 + $0x20] sm:$0xff]
      %v454 = vld [vmem:[%s281 + $0x28] sm:$0xff]
      %v455 = vld [vmem:[%s281 + $0x30] sm:$0xff]
      %v456 = vld [vmem:[%s281 + $0x38] sm:$0xff]
      %v457 = vld [vmem:[%s281 + $0x40] sm:$0xff]
      %v458 = vld [vmem:[%s281 + $0x48] sm:$0xff]
      %v459 = vld [vmem:[%s281 + $0x50] sm:$0xff]
      %v460 = vld [vmem:[%s281 + $0x58] sm:$0xff]
      %v461 = vld [vmem:[%s281 + $0x60] sm:$0xff]
      %v462 = vld [vmem:[%s281 + $0x68] sm:$0xff]
      %v463 = vld [vmem:[%s281 + $0x70] sm:$0xff]
      %v464 = vld [vmem:[%s281 + $0x78] sm:$0xff]
      %v465 = vld [vmem:[%s284] sm:$0x1]
      %v467 = vlaneseq
      %v468 = vshrl.u32 %v467, 7
      %v469 = vsub.s32 0, %v468
      %v470 = vrot.slane %v465, %v469
      %472 = vmatprep.subr.mxu0 0.0
      %473 = vmatpush1.msra.mxu0 %v464
      %474 = vmatprep.subr.mxu0 0.0
      %475 = vmatpush1.msra.mxu0 %v463
      %476 = vmatprep.subr.mxu0 0.0
      %477 = vmatpush1.msra.mxu0 %v462
      %478 = vmatprep.subr.mxu0 0.0
      %479 = vmatpush1.msra.mxu0 %v461
      %480 = vmatprep.subr.mxu0 0.0
      %481 = vmatpush1.msra.mxu0 %v460
      %482 = vmatprep.subr.mxu0 0.0
      %483 = vmatpush1.msra.mxu0 %v459
      %484 = vmatprep.subr.mxu0 0.0
      %485 = vmatpush1.msra.mxu0 %v458
      %486 = vmatprep.subr.mxu0 0.0
      %487 = vmatpush1.msra.mxu0 %v457
      %488 = vmatprep.subr.mxu0 0.0
      %489 = vmatpush1.msra.mxu0 %v456
      %490 = vmatprep.subr.mxu0 0.0
      %491 = vmatpush1.msra.mxu0 %v455
      %492 = vmatprep.subr.mxu0 0.0
      %493 = vmatpush1.msra.mxu0 %v454
      %494 = vmatprep.subr.mxu0 0.0
      %495 = vmatpush1.msra.mxu0 %v453
      %496 = vmatprep.subr.mxu0 0.0
      %497 = vmatpush1.msra.mxu0 %v452
      %498 = vmatprep.subr.mxu0 0.0
      %499 = vmatpush1.msra.mxu0 %v451
      %500 = vmatprep.subr.mxu0 0.0
      %501 = vmatpush1.msra.mxu0 %v450
      %502 = vmatprep.subr.mxu0 0.0
      %503 = vmatpush1.msra.mxu0 %v449
      %504 = vmatprep.subr.mxu0 0.0
      %505 = vmatpush2.msra.mxu0 0.0
      %506 = vmatprep.subr.mxu0 0.0
      %507 = vmatpush2.msra.mxu0 0.0
      %508 = vmatprep.subr.mxu0 0.0
      %509 = vmatpush2.msra.mxu0 0.0
      %510 = vmatprep.subr.mxu0 0.0
      %511 = vmatpush2.msra.mxu0 0.0
      %512 = vmatprep.subr.mxu0 0.0
      %513 = vmatpush2.msra.mxu0 0.0
      %514 = vmatprep.subr.mxu0 0.0
      %515 = vmatpush2.msra.mxu0 0.0
      %516 = vmatprep.subr.mxu0 0.0
      %517 = vmatpush2.msra.mxu0 0.0
      %518 = vmatprep.subr.mxu0 0.0
      %519 = vmatpush2.msra.mxu0 0.0
      %520 = vmatprep.subr.mxu0 0.0
      %521 = vmatpush2.msra.mxu0 0.0
      %522 = vmatprep.subr.mxu0 0.0
      %523 = vmatpush2.msra.mxu0 0.0
      %524 = vmatprep.subr.mxu0 0.0
      %525 = vmatpush2.msra.mxu0 0.0
      %526 = vmatprep.subr.mxu0 0.0
      %527 = vmatpush2.msra.mxu0 0.0
      %528 = vmatprep.subr.mxu0 0.0
      %529 = vmatpush2.msra.mxu0 0.0
      %530 = vmatprep.subr.mxu0 0.0
      %531 = vmatpush2.msra.mxu0 0.0
      %532 = vmatprep.subr.mxu0 0.0
      %533 = vmatpush2.msra.mxu0 0.0
      %534 = vmatprep.subr.mxu0 0.0
      %535 = vmatpush2.msra.mxu0 0.0
      %536 = vmatprep.mubr.f32.mxu0 0.0
      %537 = vmatmul.mubr.f32.gmra.mxu0 %v447
      %v538 = vpop.f32.mrf.mxu0
      %v539 = vadd.f32 %v470, %v538
      %v540 = vpop.f32.mrf.mxu0
      %541 = vmatprep.mubr.f32.mxu0 0.0
      %542 = vmatmul.mubr.f32.gmra.mxu0 %v448
      %v543 = vpop.f32.mrf.mxu0
      %v544 = vadd.f32 %v470, %v543
      %v545 = vpop.f32.mrf.mxu0
      %546 = vdwg.mxu0
      %v547 = vmax.f32 %v539, 0.0
      %v548 = vmax.f32 %v544, 0.0
      %549 = vst [vmem:[#allocation2] sm:$0xff] %v547
      %550 = vst [vmem:[#allocation2 + $0x8] sm:$0xff] %v548
      %p551 = scmp.eq.s32.totalorder %s17, 4
      // Predicated region
      $region49: #{imbgnn_forward.4} parent=43 // pred_check
        %p552 = pneg %p551
      $region50: #{imbgnn_forward.4} parent=43 // pred_check_branch
        %554 = sbr.rel (%p552) target = $region52
      $region51: #{imbgnn_forward.4} parent=43 // pred_region
        %555 = vst [vmem:[%s6] sm:$0xff] %v547
        %556 = vst [vmem:[%s6 + $0x8] sm:$0xff] %v548
      $region52: #{imbgnn_forward.4} parent=43 // pred_fallthru
        _
      // Predicated region
      $region53: #{imbgnn_forward.4} parent=43 // pred_check
        %p557 = pneg %p176
      $region54: #{imbgnn_forward.4} parent=43 // pred_check_branch
        %559 = sbr.rel (%p557) target = $region56
      $region55: #{imbgnn_forward.4} parent=43 // pred_region
        _
      $region56: #{imbgnn_forward.4} parent=43 // pred_fallthru
        _
      // Predicated region
      $region57: #{imbgnn_forward.4} parent=43 // pred_check
        %p560 = pneg %p176
      $region58: #{imbgnn_forward.4} parent=43 // pred_check_branch
        %562 = sbr.rel (%p560) target = $region60
      $region59: #{imbgnn_forward.4} parent=43 // pred_region
        _
      $region60: #{imbgnn_forward.4} parent=43 // pred_fallthru
        _
    $region44: #{imbgnn_forward.4} parent=5 // pred_fallthru
      _
    %p563 = scmp.le.s32.totalorder 2, %s12
    // Predicated region
    $region61: #{imbgnn_forward.4} parent=5 // pred_check
      %p564 = pneg %p563
    $region62: #{imbgnn_forward.4} parent=5 // pred_check_branch
      %566 = sbr.rel (%p564) target = $region64
    $region63: #{imbgnn_forward.4} parent=5 // pred_region
      %s567 = ssub.s32 %s12, 2
    $region64: #{imbgnn_forward.4} parent=5 // pred_fallthru
      _
  $region6: #{imbgnn_forward.4} parent=0 // loop_footer
    %s16 = sadd.s32 1, %s12
  $region7: #{imbgnn_forward.4} parent=0 // loop_footer_branch
    %11 = sbr.rel target = $region3
  $region8: #{imbgnn_forward.4} parent=0 // loop_exit
    _

// kernel: imbgnn_forward.5
$region0: #{imbgnn_forward.5}
  #allocation0 [shape = 'u32[]', space=smem, size = 0x4, offset = 0x4, fixed_abs, tag = 'smem constant byte address 0x4 - core index']
  #allocation1 [shape = 'u32[144,128]{1,0:T(1,128)}', space=vmem, size = 0x12000, scoped, tag = 'internal scratch']
  %s0 = inlined_call_operand.vmem [shape: f32[16,128], index: 0, kind: input, shape index: {}]
  %s1 = inlined_call_operand.vmem [shape: f32[16,128], index: 1, kind: input, shape index: {}]
  %s2 = inlined_call_operand.vmem [shape: f32[128,128], index: 2, kind: input, shape index: {}]
  %s3 = inlined_call_operand.vmem [shape: f32[1,128], index: 3, kind: input, shape index: {}]
  %s4 = inlined_call_operand.vmem [shape: f32[128,128], index: 4, kind: input, shape index: {}]
  %s5 = inlined_call_operand.vmem [shape: f32[1,128], index: 5, kind: input, shape index: {}]
  %s6 = inlined_call_operand.vmem [shape: f32[16,128], index: 6, kind: output, shape index: {}]
  %s7 = sld [smem:[#allocation0]]
  $region34: #{imbgnn_forward.5} parent=0
    _
  %s9 = ssub.s32 1, %s7
  %s10 = scalar_select 0, %s9, %s7
  // Predicated region
  $region2: #{imbgnn_forward.5} parent=0 // pred_check
    _
  $region3: #{imbgnn_forward.5} parent=0 // pred_check_branch
    %12 = sbr.rel (0) target = $region5
  $region4: #{imbgnn_forward.5} parent=0 // pred_region
    _
  $region5: #{imbgnn_forward.5} parent=0 // pred_fallthru
    _
  // Predicated region
  $region6: #{imbgnn_forward.5} parent=0 // pred_check
    _
  $region7: #{imbgnn_forward.5} parent=0 // pred_check_branch
    %14 = sbr.rel (0) target = $region9
  $region8: #{imbgnn_forward.5} parent=0 // pred_region
    _
  $region9: #{imbgnn_forward.5} parent=0 // pred_fallthru
    _
  // Predicated region
  $region10: #{imbgnn_forward.5} parent=0 // pred_check
    _
  $region11: #{imbgnn_forward.5} parent=0 // pred_check_branch
    %16 = sbr.rel (0) target = $region13
  $region12: #{imbgnn_forward.5} parent=0 // pred_region
    _
  $region13: #{imbgnn_forward.5} parent=0 // pred_fallthru
    _
  // Predicated region
  $region14: #{imbgnn_forward.5} parent=0 // pred_check
    _
  $region15: #{imbgnn_forward.5} parent=0 // pred_check_branch
    %18 = sbr.rel (0) target = $region17
  $region16: #{imbgnn_forward.5} parent=0 // pred_region
    _
  $region17: #{imbgnn_forward.5} parent=0 // pred_fallthru
    _
  // Predicated region
  $region18: #{imbgnn_forward.5} parent=0 // pred_check
    _
  $region19: #{imbgnn_forward.5} parent=0 // pred_check_branch
    %20 = sbr.rel (0) target = $region21
  $region20: #{imbgnn_forward.5} parent=0 // pred_region
    _
  $region21: #{imbgnn_forward.5} parent=0 // pred_fallthru
    _
  // Predicated region
  $region22: #{imbgnn_forward.5} parent=0 // pred_check
    _
  $region23: #{imbgnn_forward.5} parent=0 // pred_check_branch
    %22 = sbr.rel (0) target = $region25
  $region24: #{imbgnn_forward.5} parent=0 // pred_region
    _
  $region25: #{imbgnn_forward.5} parent=0 // pred_fallthru
    _
  %v23 = vld [vmem:[%s0] sm:$0xff]
  %v24 = vld [vmem:[%s0 + $0x8] sm:$0xff]
  %v25 = vld [vmem:[%s1] sm:$0xff]
  %v26 = vld [vmem:[%s1 + $0x8] sm:$0xff]
  %v27 = vmul.f32 %v23, %v25
  %v28 = vmul.f32 %v24, %v26
  %v29 = vld [vmem:[%s2] sm:$0xff]
  %v30 = vld [vmem:[%s2 + $0x8] sm:$0xff]
  %v31 = vld [vmem:[%s2 + $0x10] sm:$0xff]
  %v32 = vld [vmem:[%s2 + $0x18] sm:$0xff]
  %v33 = vld [vmem:[%s2 + $0x20] sm:$0xff]
  %v34 = vld [vmem:[%s2 + $0x28] sm:$0xff]
  %v35 = vld [vmem:[%s2 + $0x30] sm:$0xff]
  %v36 = vld [vmem:[%s2 + $0x38] sm:$0xff]
  %v37 = vld [vmem:[%s2 + $0x40] sm:$0xff]
  %v38 = vld [vmem:[%s2 + $0x48] sm:$0xff]
  %v39 = vld [vmem:[%s2 + $0x50] sm:$0xff]
  %v40 = vld [vmem:[%s2 + $0x58] sm:$0xff]
  %v41 = vld [vmem:[%s2 + $0x60] sm:$0xff]
  %v42 = vld [vmem:[%s2 + $0x68] sm:$0xff]
  %v43 = vld [vmem:[%s2 + $0x70] sm:$0xff]
  %v44 = vld [vmem:[%s2 + $0x78] sm:$0xff]
  %v45 = vld [vmem:[%s3] sm:$0x1]
  %v47 = vlaneseq
  %v48 = vshrl.u32 %v47, 7
  %v49 = vsub.s32 0, %v48
  %v50 = vrot.slane %v45, %v49
  %52 = vmatprep.subr.mxu0 0.0
  %53 = vmatpush1.msra.mxu0 %v44
  %54 = vmatprep.subr.mxu0 0.0
  %55 = vmatpush1.msra.mxu0 %v43
  %56 = vmatprep.subr.mxu0 0.0
  %57 = vmatpush1.msra.mxu0 %v42
  %58 = vmatprep.subr.mxu0 0.0
  %59 = vmatpush1.msra.mxu0 %v41
  %60 = vmatprep.subr.mxu0 0.0
  %61 = vmatpush1.msra.mxu0 %v40
  %62 = vmatprep.subr.mxu0 0.0
  %63 = vmatpush1.msra.mxu0 %v39
  %64 = vmatprep.subr.mxu0 0.0
  %65 = vmatpush1.msra.mxu0 %v38
  %66 = vmatprep.subr.mxu0 0.0
  %67 = vmatpush1.msra.mxu0 %v37
  %68 = vmatprep.subr.mxu0 0.0
  %69 = vmatpush1.msra.mxu0 %v36
  %70 = vmatprep.subr.mxu0 0.0
  %71 = vmatpush1.msra.mxu0 %v35
  %72 = vmatprep.subr.mxu0 0.0
  %73 = vmatpush1.msra.mxu0 %v34
  %74 = vmatprep.subr.mxu0 0.0
  %75 = vmatpush1.msra.mxu0 %v33
  %76 = vmatprep.subr.mxu0 0.0
  %77 = vmatpush1.msra.mxu0 %v32
  %78 = vmatprep.subr.mxu0 0.0
  %79 = vmatpush1.msra.mxu0 %v31
  %80 = vmatprep.subr.mxu0 0.0
  %81 = vmatpush1.msra.mxu0 %v30
  %82 = vmatprep.subr.mxu0 0.0
  %83 = vmatpush1.msra.mxu0 %v29
  %84 = vmatprep.subr.mxu0 0.0
  %85 = vmatpush2.msra.mxu0 0.0
  %86 = vmatprep.subr.mxu0 0.0
  %87 = vmatpush2.msra.mxu0 0.0
  %88 = vmatprep.subr.mxu0 0.0
  %89 = vmatpush2.msra.mxu0 0.0
  %90 = vmatprep.subr.mxu0 0.0
  %91 = vmatpush2.msra.mxu0 0.0
  %92 = vmatprep.subr.mxu0 0.0
  %93 = vmatpush2.msra.mxu0 0.0
  %94 = vmatprep.subr.mxu0 0.0
  %95 = vmatpush2.msra.mxu0 0.0
  %96 = vmatprep.subr.mxu0 0.0
  %97 = vmatpush2.msra.mxu0 0.0
  %98 = vmatprep.subr.mxu0 0.0
  %99 = vmatpush2.msra.mxu0 0.0
  %100 = vmatprep.subr.mxu0 0.0
  %101 = vmatpush2.msra.mxu0 0.0
  %102 = vmatprep.subr.mxu0 0.0
  %103 = vmatpush2.msra.mxu0 0.0
  %104 = vmatprep.subr.mxu0 0.0
  %105 = vmatpush2.msra.mxu0 0.0
  %106 = vmatprep.subr.mxu0 0.0
  %107 = vmatpush2.msra.mxu0 0.0
  %108 = vmatprep.subr.mxu0 0.0
  %109 = vmatpush2.msra.mxu0 0.0
  %110 = vmatprep.subr.mxu0 0.0
  %111 = vmatpush2.msra.mxu0 0.0
  %112 = vmatprep.subr.mxu0 0.0
  %113 = vmatpush2.msra.mxu0 0.0
  %114 = vmatprep.subr.mxu0 0.0
  %115 = vmatpush2.msra.mxu0 0.0
  %116 = vmatprep.mubr.f32.mxu0 0.0
  %117 = vmatmul.mubr.f32.gmra.mxu0 %v27
  %v118 = vpop.f32.mrf.mxu0
  %v119 = vadd.f32 %v50, %v118
  %v120 = vpop.f32.mrf.mxu0
  %121 = vmatprep.mubr.f32.mxu0 0.0
  %122 = vmatmul.mubr.f32.gmra.mxu0 %v28
  %v123 = vpop.f32.mrf.mxu0
  %v124 = vadd.f32 %v50, %v123
  %v125 = vpop.f32.mrf.mxu0
  %126 = vdwg.mxu0
  %v127 = vmax.f32 %v119, 0.0
  %v128 = vmax.f32 %v124, 0.0
  %v129 = vld [vmem:[%s4] sm:$0xff]
  %v130 = vld [vmem:[%s4 + $0x8] sm:$0xff]
  %v131 = vld [vmem:[%s4 + $0x10] sm:$0xff]
  %v132 = vld [vmem:[%s4 + $0x18] sm:$0xff]
  %v133 = vld [vmem:[%s4 + $0x20] sm:$0xff]
  %v134 = vld [vmem:[%s4 + $0x28] sm:$0xff]
  %v135 = vld [vmem:[%s4 + $0x30] sm:$0xff]
  %v136 = vld [vmem:[%s4 + $0x38] sm:$0xff]
  %v137 = vld [vmem:[%s4 + $0x40] sm:$0xff]
  %v138 = vld [vmem:[%s4 + $0x48] sm:$0xff]
  %v139 = vld [vmem:[%s4 + $0x50] sm:$0xff]
  %v140 = vld [vmem:[%s4 + $0x58] sm:$0xff]
  %v141 = vld [vmem:[%s4 + $0x60] sm:$0xff]
  %v142 = vld [vmem:[%s4 + $0x68] sm:$0xff]
  %v143 = vld [vmem:[%s4 + $0x70] sm:$0xff]
  %v144 = vld [vmem:[%s4 + $0x78] sm:$0xff]
  %v145 = vld [vmem:[%s5] sm:$0x1]
  %v147 = vlaneseq
  %v148 = vshrl.u32 %v147, 7
  %v149 = vsub.s32 0, %v148
  %v150 = vrot.slane %v145, %v149
  %152 = vmatprep.subr.mxu0 0.0
  %153 = vmatpush1.msra.mxu0 %v144
  %154 = vmatprep.subr.mxu0 0.0
  %155 = vmatpush1.msra.mxu0 %v143
  %156 = vmatprep.subr.mxu0 0.0
  %157 = vmatpush1.msra.mxu0 %v142
  %158 = vmatprep.subr.mxu0 0.0
  %159 = vmatpush1.msra.mxu0 %v141
  %160 = vmatprep.subr.mxu0 0.0
  %161 = vmatpush1.msra.mxu0 %v140
  %162 = vmatprep.subr.mxu0 0.0
  %163 = vmatpush1.msra.mxu0 %v139
  %164 = vmatprep.subr.mxu0 0.0
  %165 = vmatpush1.msra.mxu0 %v138
  %166 = vmatprep.subr.mxu0 0.0
  %167 = vmatpush1.msra.mxu0 %v137
  %168 = vmatprep.subr.mxu0 0.0
  %169 = vmatpush1.msra.mxu0 %v136
  %170 = vmatprep.subr.mxu0 0.0
  %171 = vmatpush1.msra.mxu0 %v135
  %172 = vmatprep.subr.mxu0 0.0
  %173 = vmatpush1.msra.mxu0 %v134
  %174 = vmatprep.subr.mxu0 0.0
  %175 = vmatpush1.msra.mxu0 %v133
  %176 = vmatprep.subr.mxu0 0.0
  %177 = vmatpush1.msra.mxu0 %v132
  %178 = vmatprep.subr.mxu0 0.0
  %179 = vmatpush1.msra.mxu0 %v131
  %180 = vmatprep.subr.mxu0 0.0
  %181 = vmatpush1.msra.mxu0 %v130
  %182 = vmatprep.subr.mxu0 0.0
  %183 = vmatpush1.msra.mxu0 %v129
  %184 = vmatprep.subr.mxu0 0.0
  %185 = vmatpush2.msra.mxu0 0.0
  %186 = vmatprep.subr.mxu0 0.0
  %187 = vmatpush2.msra.mxu0 0.0
  %188 = vmatprep.subr.mxu0 0.0
  %189 = vmatpush2.msra.mxu0 0.0
  %190 = vmatprep.subr.mxu0 0.0
  %191 = vmatpush2.msra.mxu0 0.0
  %192 = vmatprep.subr.mxu0 0.0
  %193 = vmatpush2.msra.mxu0 0.0
  %194 = vmatprep.subr.mxu0 0.0
  %195 = vmatpush2.msra.mxu0 0.0
  %196 = vmatprep.subr.mxu0 0.0
  %197 = vmatpush2.msra.mxu0 0.0
  %198 = vmatprep.subr.mxu0 0.0
  %199 = vmatpush2.msra.mxu0 0.0
  %200 = vmatprep.subr.mxu0 0.0
  %201 = vmatpush2.msra.mxu0 0.0
  %202 = vmatprep.subr.mxu0 0.0
  %203 = vmatpush2.msra.mxu0 0.0
  %204 = vmatprep.subr.mxu0 0.0
  %205 = vmatpush2.msra.mxu0 0.0
  %206 = vmatprep.subr.mxu0 0.0
  %207 = vmatpush2.msra.mxu0 0.0
  %208 = vmatprep.subr.mxu0 0.0
  %209 = vmatpush2.msra.mxu0 0.0
  %210 = vmatprep.subr.mxu0 0.0
  %211 = vmatpush2.msra.mxu0 0.0
  %212 = vmatprep.subr.mxu0 0.0
  %213 = vmatpush2.msra.mxu0 0.0
  %214 = vmatprep.subr.mxu0 0.0
  %215 = vmatpush2.msra.mxu0 0.0
  %216 = vmatprep.mubr.f32.mxu0 0.0
  %217 = vmatmul.mubr.f32.gmra.mxu0 %v127
  %v218 = vpop.f32.mrf.mxu0
  %v219 = vadd.f32 %v150, %v218
  %v220 = vpop.f32.mrf.mxu0
  %221 = vmatprep.mubr.f32.mxu0 0.0
  %222 = vmatmul.mubr.f32.gmra.mxu0 %v128
  %v223 = vpop.f32.mrf.mxu0
  %v224 = vadd.f32 %v150, %v223
  %v225 = vpop.f32.mrf.mxu0
  %226 = vdwg.mxu0
  %227 = vmax.xlane.f32.xlu0 %v219
  %v228 = vpop.xlane.xlu0 %227
  %229 = vmax.xlane.f32.xlu0 %v224
  %v230 = vpop.xlane.xlu0 %229
  %v231 = vsub.f32 %v219, %v228
  %v232 = vsub.f32 %v224, %v230
  %v233 = vmul.f32 %v231, 1.442695
  %v234 = vpow.pop %v233
  %v235 = vmul.f32 %v232, 1.442695
  %v236 = vpow.pop %v235
  %237 = vadd.xlane.f32.xlu0 %v234
  %v238 = vpop.xlane.xlu0 %237
  %239 = vadd.xlane.f32.xlu0 %v236
  %v240 = vpop.xlane.xlu0 %239
  %v241 = vlog2.pop %v238
  %v242 = vmul.f32 %v241, 0.6931472
  %v243 = vlog2.pop %v240
  %v244 = vmul.f32 %v243, 0.6931472
  %v245 = vadd.f32 %v242, %v228
  %v246 = vadd.f32 %v244, %v230
  %v247 = vsub.f32 %v219, %v245
  %v248 = vsub.f32 %v224, %v246
  %249 = vst [vmem:[%s6] sm:$0xff] %v247
  %250 = vst [vmem:[%s6 + $0x8] sm:$0xff] %v248
  // Predicated region
  $region26: #{imbgnn_forward.5} parent=0 // pred_check
    _
  $region27: #{imbgnn_forward.5} parent=0 // pred_check_branch
    %252 = sbr.rel (0) target = $region29
  $region28: #{imbgnn_forward.5} parent=0 // pred_region
    _
  $region29: #{imbgnn_forward.5} parent=0 // pred_fallthru
    _
  // Predicated region
  $region30: #{imbgnn_forward.5} parent=0 // pred_check
    _
  $region31: #{imbgnn_forward.5} parent=0 // pred_check_branch
    %254 = sbr.rel (0) target = $region33
  $region32: #{imbgnn_forward.5} parent=0 // pred_region
    _
  $region33: #{imbgnn_forward.5} parent=0 // pred_fallthru
    _

// kernel: imbgnn_forward.3
$region0: #{imbgnn_forward.3}
  #allocation0 [shape = 'u32[]', space=smem, size = 0x4, offset = 0x4, fixed_abs, tag = 'smem constant byte address 0x4 - core index']
  #allocation1 [shape = 'u32[144,128]{1,0:T(1,128)}', space=vmem, size = 0x12000, scoped, tag = 'internal scratch']
  #allocation2 [shape = 'f32[16,384]{1,0:T(8,128)}', space=vmem, size = 0x6000, scoped, tag = 'scratch operand']
  #allocation3 [shape = 'f32[16,128]{1,0:T(8,128)}', space=vmem, size = 0x2000, scoped, tag = 'scratch operand']
  %s0 = inlined_call_operand.vmem [shape: f32[16,128], index: 0, kind: input, shape index: {}]
  %s1 = inlined_call_operand.vmem [shape: f32[1,128], index: 1, kind: input, shape index: {}]
  %s2 = inlined_call_operand.vmem [shape: f32[1,128], index: 2, kind: input, shape index: {}]
  %s3 = inlined_call_operand.hbm [shape: f32[128,128], index: 3, kind: input, shape index: {}]
  %s4 = inlined_call_operand.vmem [shape: f32[1,128], index: 4, kind: input, shape index: {}]
  %s5 = inlined_call_operand.hbm [shape: f32[128,128], index: 5, kind: input, shape index: {}]
  %s6 = inlined_call_operand.vmem [shape: f32[1,128], index: 6, kind: input, shape index: {}]
  %s7 = inlined_call_operand.hbm [shape: f32[128,384], index: 7, kind: input, shape index: {}]
  %s8 = inlined_call_operand.vmem [shape: f32[1,384], index: 8, kind: input, shape index: {}]
  %s9 = inlined_call_operand.hbm [shape: f32[128,384], index: 9, kind: input, shape index: {}]
  %s10 = inlined_call_operand.vmem [shape: f32[1,384], index: 10, kind: input, shape index: {}]
  %s11 = inlined_call_operand.vmem [shape: f32[16,128], index: 11, kind: output, shape index: {}]
  %s12 = sld [smem:[#allocation0]]
  $region77: #{imbgnn_forward.3} parent=0
    _
  %s14 = ssub.s32 1, %s12
  %s15 = scalar_select 0, %s14, %s12
  $region1: #{imbgnn_forward.3} parent=0
    #allocation4 [shape = 'u8[65536]{0}', space=vmem, size = 0x10000, scoped, tag = 'input window, operand 3, single buffered']
    #allocation5 [shape = 's32[1]{0}', space=sflag, size = 0x4, scoped, tag = 'scoped memory for imbgnn_forward.3']
    #allocation6 [shape = 'u8[65536]{0}', space=vmem, size = 0x10000, scoped, tag = 'input window, operand 5, single buffered']
    #allocation7 [shape = 's32[1]{0}', space=sflag, size = 0x4, scoped, tag = 'scoped memory for imbgnn_forward.3']
    #allocation8 [shape = 'u8[196608]{0}', space=vmem, size = 0x30000, scoped, tag = 'input window, operand 7, single buffered']
    #allocation9 [shape = 'u8[196608]{0}', space=vmem, size = 0x30000, scoped, tag = 'input window, operand 9, single buffered']
    #allocation10 [shape = 's32[1]{0}', space=sflag, size = 0x4, scoped, tag = 'scoped memory for imbgnn_forward.3']
    %16 = vsyncpa [#allocation5], 0
    %17 = vsyncpa [#allocation7], 0
    %18 = vsyncpa [#allocation10], 0
    // Predicated region
    $region2: #{imbgnn_forward.3} parent=1 // pred_check
      _
    $region3: #{imbgnn_forward.3} parent=1 // pred_check_branch
      %20 = sbr.rel (0) target = $region5
    $region4: #{imbgnn_forward.3} parent=1 // pred_region
      _
    $region5: #{imbgnn_forward.3} parent=1 // pred_fallthru
      _
    // Predicated region
    $region6: #{imbgnn_forward.3} parent=1 // pred_check
      _
    $region7: #{imbgnn_forward.3} parent=1 // pred_check_branch
      %22 = sbr.rel (0) target = $region9
    $region8: #{imbgnn_forward.3} parent=1 // pred_region
      _
    $region9: #{imbgnn_forward.3} parent=1 // pred_fallthru
      _
    // Predicated region
    $region10: #{imbgnn_forward.3} parent=1 // pred_check
      _
    $region11: #{imbgnn_forward.3} parent=1 // pred_check_branch
      %24 = sbr.rel (0) target = $region13
    $region12: #{imbgnn_forward.3} parent=1 // pred_region
      _
    $region13: #{imbgnn_forward.3} parent=1 // pred_fallthru
      _
    // Predicated region
    $region14: #{imbgnn_forward.3} parent=1 // pred_check
      _
    $region15: #{imbgnn_forward.3} parent=1 // pred_check_branch
      %26 = sbr.rel (0) target = $region17
    $region16: #{imbgnn_forward.3} parent=1 // pred_region
      %s28 = ssub.s32 2048, 2048
      %29 = vsyncadd [#allocation5], %s28
      %s30 = sshll.u32 [#allocation4], 4
      %s31 = int_to_ptr.vmem [resolvable:$true] %s30
      %36 = dma.hbm_to_vmem [thread:$0]  %s3, 2048, %s31, [#allocation5], 128, 128, 8
    $region17: #{imbgnn_forward.3} parent=1 // pred_fallthru
      _
    // Predicated region
    $region18: #{imbgnn_forward.3} parent=1 // pred_check
      _
    $region19: #{imbgnn_forward.3} parent=1 // pred_check_branch
      %38 = sbr.rel (0) target = $region21
    $region20: #{imbgnn_forward.3} parent=1 // pred_region
      _
    $region21: #{imbgnn_forward.3} parent=1 // pred_fallthru
      _
    // Predicated region
    $region22: #{imbgnn_forward.3} parent=1 // pred_check
      _
    $region23: #{imbgnn_forward.3} parent=1 // pred_check_branch
      %40 = sbr.rel (0) target = $region25
    $region24: #{imbgnn_forward.3} parent=1 // pred_region
      %s42 = ssub.s32 2048, 2048
      %43 = vsyncadd [#allocation7], %s42
      %s44 = sshll.u32 [#allocation6], 4
      %s45 = int_to_ptr.vmem [resolvable:$true] %s44
      %50 = dma.hbm_to_vmem [thread:$0]  %s5, 2048, %s45, [#allocation7], 128, 128, 8
    $region25: #{imbgnn_forward.3} parent=1 // pred_fallthru
      _
    // Predicated region
    $region26: #{imbgnn_forward.3} parent=1 // pred_check
      _
    $region27: #{imbgnn_forward.3} parent=1 // pred_check_branch
      %52 = sbr.rel (0) target = $region29
    $region28: #{imbgnn_forward.3} parent=1 // pred_region
      _
    $region29: #{imbgnn_forward.3} parent=1 // pred_fallthru
      _
    // Predicated region
    $region30: #{imbgnn_forward.3} parent=1 // pred_check
      _
    $region31: #{imbgnn_forward.3} parent=1 // pred_check_branch
      %54 = sbr.rel (0) target = $region33
    $region32: #{imbgnn_forward.3} parent=1 // pred_region
      %s56 = ssub.s32 6144, 6144
      %57 = vsyncadd [#allocation7], %s56
      %s58 = sshll.u32 [#allocation8], 4
      %s59 = int_to_ptr.vmem [resolvable:$true] %s58
      %64 = dma.hbm_to_vmem [thread:$0]  %s7, 6144, %s59, [#allocation7], 384, 384, 24
    $region33: #{imbgnn_forward.3} parent=1 // pred_fallthru
      _
    // Predicated region
    $region34: #{imbgnn_forward.3} parent=1 // pred_check
      _
    $region35: #{imbgnn_forward.3} parent=1 // pred_check_branch
      %66 = sbr.rel (0) target = $region37
    $region36: #{imbgnn_forward.3} parent=1 // pred_region
      _
    $region37: #{imbgnn_forward.3} parent=1 // pred_fallthru
      _
    // Predicated region
    $region38: #{imbgnn_forward.3} parent=1 // pred_check
      _
    $region39: #{imbgnn_forward.3} parent=1 // pred_check_branch
      %68 = sbr.rel (0) target = $region41
    $region40: #{imbgnn_forward.3} parent=1 // pred_region
      %s70 = ssub.s32 6144, 6144
      %71 = vsyncadd [#allocation10], %s70
      %s72 = sshll.u32 [#allocation9], 4
      %s73 = int_to_ptr.vmem [resolvable:$true] %s72
      %78 = dma.hbm_to_vmem [thread:$0]  %s9, 6144, %s73, [#allocation10], 384, 384, 24
    $region41: #{imbgnn_forward.3} parent=1 // pred_fallthru
      _
    // Predicated region
    $region42: #{imbgnn_forward.3} parent=1 // pred_check
      _
    $region43: #{imbgnn_forward.3} parent=1 // pred_check_branch
      %80 = sbr.rel (0) target = $region45
    $region44: #{imbgnn_forward.3} parent=1 // pred_region
      _
    $region45: #{imbgnn_forward.3} parent=1 // pred_fallthru
      _
    // Predicated region
    $region46: #{imbgnn_forward.3} parent=1 // pred_check
      _
    $region47: #{imbgnn_forward.3} parent=1 // pred_check_branch
      %82 = sbr.rel (0) target = $region49
    $region48: #{imbgnn_forward.3} parent=1 // pred_region
      %83 = dma.done [#allocation5], 2048
    $region49: #{imbgnn_forward.3} parent=1 // pred_fallthru
      _
    // Predicated region
    $region50: #{imbgnn_forward.3} parent=1 // pred_check
      _
    $region51: #{imbgnn_forward.3} parent=1 // pred_check_branch
      %85 = sbr.rel (0) target = $region53
    $region52: #{imbgnn_forward.3} parent=1 // pred_region
      %86 = dma.done [#allocation7], 2048
    $region53: #{imbgnn_forward.3} parent=1 // pred_fallthru
      _
    // Predicated region
    $region54: #{imbgnn_forward.3} parent=1 // pred_check
      _
    $region55: #{imbgnn_forward.3} parent=1 // pred_check_branch
      %88 = sbr.rel (0) target = $region57
    $region56: #{imbgnn_forward.3} parent=1 // pred_region
      %89 = dma.done [#allocation7], 6144
    $region57: #{imbgnn_forward.3} parent=1 // pred_fallthru
      _
    // Predicated region
    $region58: #{imbgnn_forward.3} parent=1 // pred_check
      _
    $region59: #{imbgnn_forward.3} parent=1 // pred_check_branch
      %91 = sbr.rel (0) target = $region61
    $region60: #{imbgnn_forward.3} parent=1 // pred_region
      %92 = dma.done [#allocation10], 6144
    $region61: #{imbgnn_forward.3} parent=1 // pred_fallthru
      _
    %v93 = vld [vmem:[%s0] sm:$0xff]
    %v94 = vld [vmem:[%s0 + $0x8] sm:$0xff]
    %v95 = vlaneseq
    %v96 = vand.u32 %v95, 127
    %vm97 = vcmp.lt.s32.totalorder %v96, 32
    %v98 = vsel %vm97, 1, 0
    %v99 = vcvt.s32.f32 %v98
    %100 = vadd.xlane.f32.xlu0 %v93
    %v101 = vpop.xlane.xlu0 %100
    %102 = vadd.xlane.f32.xlu0 %v94
    %v103 = vpop.xlane.xlu0 %102
    %v104 = vmul.f32 %v101, 0.03125
    %v105 = vmul.f32 %v103, 0.03125
    %v106 = vsub.f32 %v93, %v104
    %v107 = vsub.f32 %v94, %v105
    %v108 = vmul.f32 %v106, %v99
    %v109 = vmul.f32 %v107, %v99
    %v110 = vmul.f32 %v108, %v108
    %v111 = vmul.f32 %v109, %v109
    %112 = vadd.xlane.f32.xlu0 %v110
    %v113 = vpop.xlane.xlu0 %112
    %114 = vadd.xlane.f32.xlu0 %v111
    %v115 = vpop.xlane.xlu0 %114
    %v116 = vmul.f32 %v113, 0.03125
    %v117 = vmul.f32 %v115, 0.03125
    %v118 = vadd.f32 %v116, 1e-05
    %v119 = vadd.f32 %v117, 1e-05
    %v120 = vrsqrt.pop %v118
    %v121 = vrsqrt.pop %v119
    %v122 = vmul.f32 %v108, %v120
    %v123 = vmul.f32 %v109, %v121
    %v124 = vld [vmem:[%s1] sm:$0x1]
    %v126 = vlaneseq
    %v127 = vshrl.u32 %v126, 7
    %v128 = vsub.s32 0, %v127
    %v129 = vrot.slane %v124, %v128
    %v131 = vmul.f32 %v122, %v129
    %v132 = vmul.f32 %v123, %v129
    %v133 = vld [vmem:[%s2] sm:$0x1]
    %v135 = vlaneseq
    %v136 = vshrl.u32 %v135, 7
    %v137 = vsub.s32 0, %v136
    %v138 = vrot.slane %v133, %v137
    %v140 = vadd.f32 %v131, %v138
    %v141 = vadd.f32 %v132, %v138
    %v142 = vld [vmem:[#allocation4] sm:$0xff]
    %v143 = vld [vmem:[#allocation4 + $0x8] sm:$0xff]
    %v144 = vld [vmem:[#allocation4 + $0x10] sm:$0xff]
    %v145 = vld [vmem:[#allocation4 + $0x18] sm:$0xff]
    %v146 = vld [vmem:[#allocation4 + $0x20] sm:$0xff]
    %v147 = vld [vmem:[#allocation4 + $0x28] sm:$0xff]
    %v148 = vld [vmem:[#allocation4 + $0x30] sm:$0xff]
    %v149 = vld [vmem:[#allocation4 + $0x38] sm:$0xff]
    %v150 = vld [vmem:[#allocation4 + $0x40] sm:$0xff]
    %v151 = vld [vmem:[#allocation4 + $0x48] sm:$0xff]
    %v152 = vld [vmem:[#allocation4 + $0x50] sm:$0xff]
    %v153 = vld [vmem:[#allocation4 + $0x58] sm:$0xff]
    %v154 = vld [vmem:[#allocation4 + $0x60] sm:$0xff]
    %v155 = vld [vmem:[#allocation4 + $0x68] sm:$0xff]
    %v156 = vld [vmem:[#allocation4 + $0x70] sm:$0xff]
    %v157 = vld [vmem:[#allocation4 + $0x78] sm:$0xff]
    %v158 = vld [vmem:[%s4] sm:$0x1]
    %v160 = vlaneseq
    %v161 = vshrl.u32 %v160, 7
    %v162 = vsub.s32 0, %v161
    %v163 = vrot.slane %v158, %v162
    %165 = vmatprep.subr.mxu0 0.0
    %166 = vmatpush1.msra.mxu0 %v157
    %167 = vmatprep.subr.mxu0 0.0
    %168 = vmatpush1.msra.mxu0 %v156
    %169 = vmatprep.subr.mxu0 0.0
    %170 = vmatpush1.msra.mxu0 %v155
    %171 = vmatprep.subr.mxu0 0.0
    %172 = vmatpush1.msra.mxu0 %v154
    %173 = vmatprep.subr.mxu0 0.0
    %174 = vmatpush1.msra.mxu0 %v153
    %175 = vmatprep.subr.mxu0 0.0
    %176 = vmatpush1.msra.mxu0 %v152
    %177 = vmatprep.subr.mxu0 0.0
    %178 = vmatpush1.msra.mxu0 %v151
    %179 = vmatprep.subr.mxu0 0.0
    %180 = vmatpush1.msra.mxu0 %v150
    %181 = vmatprep.subr.mxu0 0.0
    %182 = vmatpush1.msra.mxu0 %v149
    %183 = vmatprep.subr.mxu0 0.0
    %184 = vmatpush1.msra.mxu0 %v148
    %185 = vmatprep.subr.mxu0 0.0
    %186 = vmatpush1.msra.mxu0 %v147
    %187 = vmatprep.subr.mxu0 0.0
    %188 = vmatpush1.msra.mxu0 %v146
    %189 = vmatprep.subr.mxu0 0.0
    %190 = vmatpush1.msra.mxu0 %v145
    %191 = vmatprep.subr.mxu0 0.0
    %192 = vmatpush1.msra.mxu0 %v144
    %193 = vmatprep.subr.mxu0 0.0
    %194 = vmatpush1.msra.mxu0 %v143
    %195 = vmatprep.subr.mxu0 0.0
    %196 = vmatpush1.msra.mxu0 %v142
    %197 = vmatprep.subr.mxu0 0.0
    %198 = vmatpush2.msra.mxu0 0.0
    %199 = vmatprep.subr.mxu0 0.0
    %200 = vmatpush2.msra.mxu0 0.0
    %201 = vmatprep.subr.mxu0 0.0
    %202 = vmatpush2.msra.mxu0 0.0
    %203 = vmatprep.subr.mxu0 0.0
    %204 = vmatpush2.msra.mxu0 0.0
    %205 = vmatprep.subr.mxu0 0.0
    %206 = vmatpush2.msra.mxu0 0.0
    %207 = vmatprep.subr.mxu0 0.0
    %208 = vmatpush2.msra.mxu0 0.0
    %209 = vmatprep.subr.mxu0 0.0
    %210 = vmatpush2.msra.mxu0 0.0
    %211 = vmatprep.subr.mxu0 0.0
    %212 = vmatpush2.msra.mxu0 0.0
    %213 = vmatprep.subr.mxu0 0.0
    %214 = vmatpush2.msra.mxu0 0.0
    %215 = vmatprep.subr.mxu0 0.0
    %216 = vmatpush2.msra.mxu0 0.0
    %217 = vmatprep.subr.mxu0 0.0
    %218 = vmatpush2.msra.mxu0 0.0
    %219 = vmatprep.subr.mxu0 0.0
    %220 = vmatpush2.msra.mxu0 0.0
    %221 = vmatprep.subr.mxu0 0.0
    %222 = vmatpush2.msra.mxu0 0.0
    %223 = vmatprep.subr.mxu0 0.0
    %224 = vmatpush2.msra.mxu0 0.0
    %225 = vmatprep.subr.mxu0 0.0
    %226 = vmatpush2.msra.mxu0 0.0
    %227 = vmatprep.subr.mxu0 0.0
    %228 = vmatpush2.msra.mxu0 0.0
    %229 = vmatprep.mubr.f32.mxu0 0.0
    %230 = vmatmul.mubr.f32.gmra.mxu0 %v140
    %v231 = vpop.f32.mrf.mxu0
    %v232 = vadd.f32 %v163, %v231
    %v233 = vpop.f32.mrf.mxu0
    %234 = vmatprep.mubr.f32.mxu0 0.0
    %235 = vmatmul.mubr.f32.gmra.mxu0 %v141
    %v236 = vpop.f32.mrf.mxu0
    %v237 = vadd.f32 %v163, %v236
    %v238 = vpop.f32.mrf.mxu0
    %239 = vdwg.mxu0
    %v240 = vmul.f32 %v232, 0.5
    %v241 = vmul.f32 %v237, 0.5
    %v242 = vmul.f32 %v232, 0.70710677
    %v243 = vmul.f32 %v237, 0.70710677
    %v244 = verf.f32.pop %v242
    %v245 = verf.f32.pop %v243
    %v246 = vadd.f32 %v244, 1.0
    %v247 = vadd.f32 %v245, 1.0
    %v248 = vmul.f32 %v240, %v246
    %v249 = vmul.f32 %v241, %v247
    %v250 = vld [vmem:[#allocation6] sm:$0xff]
    %v251 = vld [vmem:[#allocation6 + $0x8] sm:$0xff]
    %v252 = vld [vmem:[#allocation6 + $0x10] sm:$0xff]
    %v253 = vld [vmem:[#allocation6 + $0x18] sm:$0xff]
    %v254 = vld [vmem:[#allocation6 + $0x20] sm:$0xff]
    %v255 = vld [vmem:[#allocation6 + $0x28] sm:$0xff]
    %v256 = vld [vmem:[#allocation6 + $0x30] sm:$0xff]
    %v257 = vld [vmem:[#allocation6 + $0x38] sm:$0xff]
    %v258 = vld [vmem:[#allocation6 + $0x40] sm:$0xff]
    %v259 = vld [vmem:[#allocation6 + $0x48] sm:$0xff]
    %v260 = vld [vmem:[#allocation6 + $0x50] sm:$0xff]
    %v261 = vld [vmem:[#allocation6 + $0x58] sm:$0xff]
    %v262 = vld [vmem:[#allocation6 + $0x60] sm:$0xff]
    %v263 = vld [vmem:[#allocation6 + $0x68] sm:$0xff]
    %v264 = vld [vmem:[#allocation6 + $0x70] sm:$0xff]
    %v265 = vld [vmem:[#allocation6 + $0x78] sm:$0xff]
    %v266 = vld [vmem:[%s6] sm:$0x1]
    %v268 = vlaneseq
    %v269 = vshrl.u32 %v268, 7
    %v270 = vsub.s32 0, %v269
    %v271 = vrot.slane %v266, %v270
    %273 = vmatprep.subr.mxu0 0.0
    %274 = vmatpush1.msra.mxu0 %v265
    %275 = vmatprep.subr.mxu0 0.0
    %276 = vmatpush1.msra.mxu0 %v264
    %277 = vmatprep.subr.mxu0 0.0
    %278 = vmatpush1.msra.mxu0 %v263
    %279 = vmatprep.subr.mxu0 0.0
    %280 = vmatpush1.msra.mxu0 %v262
    %281 = vmatprep.subr.mxu0 0.0
    %282 = vmatpush1.msra.mxu0 %v261
    %283 = vmatprep.subr.mxu0 0.0
    %284 = vmatpush1.msra.mxu0 %v260
    %285 = vmatprep.subr.mxu0 0.0
    %286 = vmatpush1.msra.mxu0 %v259
    %287 = vmatprep.subr.mxu0 0.0
    %288 = vmatpush1.msra.mxu0 %v258
    %289 = vmatprep.subr.mxu0 0.0
    %290 = vmatpush1.msra.mxu0 %v257
    %291 = vmatprep.subr.mxu0 0.0
    %292 = vmatpush1.msra.mxu0 %v256
    %293 = vmatprep.subr.mxu0 0.0
    %294 = vmatpush1.msra.mxu0 %v255
    %295 = vmatprep.subr.mxu0 0.0
    %296 = vmatpush1.msra.mxu0 %v254
    %297 = vmatprep.subr.mxu0 0.0
    %298 = vmatpush1.msra.mxu0 %v253
    %299 = vmatprep.subr.mxu0 0.0
    %300 = vmatpush1.msra.mxu0 %v252
    %301 = vmatprep.subr.mxu0 0.0
    %302 = vmatpush1.msra.mxu0 %v251
    %303 = vmatprep.subr.mxu0 0.0
    %304 = vmatpush1.msra.mxu0 %v250
    %305 = vmatprep.subr.mxu0 0.0
    %306 = vmatpush2.msra.mxu0 0.0
    %307 = vmatprep.subr.mxu0 0.0
    %308 = vmatpush2.msra.mxu0 0.0
    %309 = vmatprep.subr.mxu0 0.0
    %310 = vmatpush2.msra.mxu0 0.0
    %311 = vmatprep.subr.mxu0 0.0
    %312 = vmatpush2.msra.mxu0 0.0
    %313 = vmatprep.subr.mxu0 0.0
    %314 = vmatpush2.msra.mxu0 0.0
    %315 = vmatprep.subr.mxu0 0.0
    %316 = vmatpush2.msra.mxu0 0.0
    %317 = vmatprep.subr.mxu0 0.0
    %318 = vmatpush2.msra.mxu0 0.0
    %319 = vmatprep.subr.mxu0 0.0
    %320 = vmatpush2.msra.mxu0 0.0
    %321 = vmatprep.subr.mxu0 0.0
    %322 = vmatpush2.msra.mxu0 0.0
    %323 = vmatprep.subr.mxu0 0.0
    %324 = vmatpush2.msra.mxu0 0.0
    %325 = vmatprep.subr.mxu0 0.0
    %326 = vmatpush2.msra.mxu0 0.0
    %327 = vmatprep.subr.mxu0 0.0
    %328 = vmatpush2.msra.mxu0 0.0
    %329 = vmatprep.subr.mxu0 0.0
    %330 = vmatpush2.msra.mxu0 0.0
    %331 = vmatprep.subr.mxu0 0.0
    %332 = vmatpush2.msra.mxu0 0.0
    %333 = vmatprep.subr.mxu0 0.0
    %334 = vmatpush2.msra.mxu0 0.0
    %335 = vmatprep.subr.mxu0 0.0
    %336 = vmatpush2.msra.mxu0 0.0
    %337 = vmatprep.mubr.f32.mxu0 0.0
    %338 = vmatmul.mubr.f32.gmra.mxu0 %v140
    %v339 = vpop.f32.mrf.mxu0
    %v340 = vadd.f32 %v271, %v339
    %v341 = vpop.f32.mrf.mxu0
    %342 = vmatprep.mubr.f32.mxu0 0.0
    %343 = vmatmul.mubr.f32.gmra.mxu0 %v141
    %v344 = vpop.f32.mrf.mxu0
    %v345 = vadd.f32 %v271, %v344
    %v346 = vpop.f32.mrf.mxu0
    %347 = vdwg.mxu0
    %v348 = vld [vmem:[#allocation8] sm:$0xff]
    %v349 = vld [vmem:[#allocation8 + $0x8] sm:$0xff]
    %v350 = vld [vmem:[#allocation8 + $0x10] sm:$0xff]
    %v351 = vld [vmem:[#allocation8 + $0x18] sm:$0xff]
    %v352 = vld [vmem:[#allocation8 + $0x20] sm:$0xff]
    %v353 = vld [vmem:[#allocation8 + $0x28] sm:$0xff]
    %v354 = vld [vmem:[#allocation8 + $0x30] sm:$0xff]
    %v355 = vld [vmem:[#allocation8 + $0x38] sm:$0xff]
    %v356 = vld [vmem:[#allocation8 + $0x40] sm:$0xff]
    %v357 = vld [vmem:[#allocation8 + $0x48] sm:$0xff]
    %v358 = vld [vmem:[#allocation8 + $0x50] sm:$0xff]
    %v359 = vld [vmem:[#allocation8 + $0x58] sm:$0xff]
    %v360 = vld [vmem:[#allocation8 + $0x60] sm:$0xff]
    %v361 = vld [vmem:[#allocation8 + $0x68] sm:$0xff]
    %v362 = vld [vmem:[#allocation8 + $0x70] sm:$0xff]
    %v363 = vld [vmem:[#allocation8 + $0x78] sm:$0xff]
    %v364 = vld [vmem:[#allocation8 + $0x80] sm:$0xff]
    %v365 = vld [vmem:[#allocation8 + $0x88] sm:$0xff]
    %v366 = vld [vmem:[#allocation8 + $0x90] sm:$0xff]
    %v367 = vld [vmem:[#allocation8 + $0x98] sm:$0xff]
    %v368 = vld [vmem:[#allocation8 + $0xa0] sm:$0xff]
    %v369 = vld [vmem:[#allocation8 + $0xa8] sm:$0xff]
    %v370 = vld [vmem:[#allocation8 + $0xb0] sm:$0xff]
    %v371 = vld [vmem:[#allocation8 + $0xb8] sm:$0xff]
    %v372 = vld [vmem:[#allocation8 + $0xc0] sm:$0xff]
    %v373 = vld [vmem:[#allocation8 + $0xc8] sm:$0xff]
    %v374 = vld [vmem:[#allocation8 + $0xd0] sm:$0xff]
    %v375 = vld [vmem:[#allocation8 + $0xd8] sm:$0xff]
    %v376 = vld [vmem:[#allocation8 + $0xe0] sm:$0xff]
    %v377 = vld [vmem:[#allocation8 + $0xe8] sm:$0xff]
    %v378 = vld [vmem:[#allocation8 + $0xf0] sm:$0xff]
    %v379 = vld [vmem:[#allocation8 + $0xf8] sm:$0xff]
    %v380 = vld [vmem:[#allocation8 + $0x100] sm:$0xff]
    %v381 = vld [vmem:[#allocation8 + $0x108] sm:$0xff]
    %v382 = vld [vmem:[#allocation8 + $0x110] sm:$0xff]
    %v383 = vld [vmem:[#allocation8 + $0x118] sm:$0xff]
    %v384 = vld [vmem:[#allocation8 + $0x120] sm:$0xff]
    %v385 = vld [vmem:[#allocation8 + $0x128] sm:$0xff]
    %v386 = vld [vmem:[#allocation8 + $0x130] sm:$0xff]
    %v387 = vld [vmem:[#allocation8 + $0x138] sm:$0xff]
    %v388 = vld [vmem:[#allocation8 + $0x140] sm:$0xff]
    %v389 = vld [vmem:[#allocation8 + $0x148] sm:$0xff]
    %v390 = vld [vmem:[#allocation8 + $0x150] sm:$0xff]
    %v391 = vld [vmem:[#allocation8 + $0x158] sm:$0xff]
    %v392 = vld [vmem:[#allocation8 + $0x160] sm:$0xff]
    %v393 = vld [vmem:[#allocation8 + $0x168] sm:$0xff]
    %v394 = vld [vmem:[#allocation8 + $0x170] sm:$0xff]
    %v395 = vld [vmem:[#allocation8 + $0x178] sm:$0xff]
    %v396 = vld [vmem:[%s8] sm:$0x7]
    %v398 = vlaneseq
    %v399 = vshrl.u32 %v398, 7
    %v400 = vsub.s32 0, %v399
    %v401 = vrot.slane %v396, %v400
    %v402 = vlaneseq
    %v403 = vshrl.u32 %v402, 7
    %v404 = vsub.s32 1, %v403
    %v405 = vrot.slane %v396, %v404
    %v406 = vlaneseq
    %v407 = vshrl.u32 %v406, 7
    %v408 = vsub.s32 2, %v407
    %v409 = vrot.slane %v396, %v408
    %413 = vmatprep.subr.mxu0 %v394
    %414 = vmatpush1.msra.mxu0 %v393
    %415 = vmatprep.subr.mxu0 %v391
    %416 = vmatpush1.msra.mxu0 %v390
    %417 = vmatprep.subr.mxu0 %v388
    %418 = vmatpush1.msra.mxu0 %v387
    %419 = vmatprep.subr.mxu0 %v385
    %420 = vmatpush1.msra.mxu0 %v384
    %421 = vmatprep.subr.mxu0 %v382
    %422 = vmatpush1.msra.mxu0 %v381
    %423 = vmatprep.subr.mxu0 %v379
    %424 = vmatpush1.msra.mxu0 %v378
    %425 = vmatprep.subr.mxu0 %v376
    %426 = vmatpush1.msra.mxu0 %v375
    %427 = vmatprep.subr.mxu0 %v373
    %428 = vmatpush1.msra.mxu0 %v372
    %429 = vmatprep.subr.mxu0 %v370
    %430 = vmatpush1.msra.mxu0 %v369
    %431 = vmatprep.subr.mxu0 %v367
    %432 = vmatpush1.msra.mxu0 %v366
    %433 = vmatprep.subr.mxu0 %v364
    %434 = vmatpush1.msra.mxu0 %v363
    %435 = vmatprep.subr.mxu0 %v361
    %436 = vmatpush1.msra.mxu0 %v360
    %437 = vmatprep.subr.mxu0 %v358
    %438 = vmatpush1.msra.mxu0 %v357
    %439 = vmatprep.subr.mxu0 %v355
    %440 = vmatpush1.msra.mxu0 %v354
    %441 = vmatprep.subr.mxu0 %v352
    %442 = vmatpush1.msra.mxu0 %v351
    %443 = vmatprep.subr.mxu0 %v349
    %444 = vmatpush1.msra.mxu0 %v348
    %445 = vmatprep.subr.mxu0 0.0
    %446 = vmatpush2.msra.mxu0 0.0
    %447 = vmatprep.subr.mxu0 0.0
    %448 = vmatpush2.msra.mxu0 0.0
    %449 = vmatprep.subr.mxu0 0.0
    %450 = vmatpush2.msra.mxu0 0.0
    %451 = vmatprep.subr.mxu0 0.0
    %452 = vmatpush2.msra.mxu0 0.0
    %453 = vmatprep.subr.mxu0 0.0
    %454 = vmatpush2.msra.mxu0 0.0
    %455 = vmatprep.subr.mxu0 0.0
    %456 = vmatpush2.msra.mxu0 0.0
    %457 = vmatprep.subr.mxu0 0.0
    %458 = vmatpush2.msra.mxu0 0.0
    %459 = vmatprep.subr.mxu0 0.0
    %460 = vmatpush2.msra.mxu0 0.0
    %461 = vmatprep.subr.mxu0 0.0
    %462 = vmatpush2.msra.mxu0 0.0
    %463 = vmatprep.subr.mxu0 0.0
    %464 = vmatpush2.msra.mxu0 0.0
    %465 = vmatprep.subr.mxu0 0.0
    %466 = vmatpush2.msra.mxu0 0.0
    %467 = vmatprep.subr.mxu0 0.0
    %468 = vmatpush2.msra.mxu0 0.0
    %469 = vmatprep.subr.mxu0 0.0
    %470 = vmatpush2.msra.mxu0 0.0
    %471 = vmatprep.subr.mxu0 0.0
    %472 = vmatpush2.msra.mxu0 0.0
    %473 = vmatprep.subr.mxu0 0.0
    %474 = vmatpush2.msra.mxu0 0.0
    %475 = vmatprep.subr.mxu0 0.0
    %476 = vmatpush2.msra.mxu0 0.0
    %477 = vmatprep.mubr.f32.mxu0 0.0
    %478 = vmatmul.mubr.f32.gmra.mxu0 %v340
    %v479 = vpop.f32.mrf.mxu0
    %v480 = vadd.f32 %v401, %v479
    %v481 = vpop.f32.mrf.mxu0
    %v482 = vadd.f32 %v405, %v481
    %483 = vmatprep.mubr.f32.mxu0 0.0
    %484 = vmatmul.mubr.f32.gmra.mxu0 %v345
    %v485 = vpop.f32.mrf.mxu0
    %v486 = vadd.f32 %v401, %v485
    %v487 = vpop.f32.mrf.mxu0
    %v488 = vadd.f32 %v405, %v487
    %489 = vdwg.mxu0
    %490 = vmatprep.subr.mxu0 0.0
    %491 = vmatpush1.msra.mxu0 %v395
    %492 = vmatprep.subr.mxu0 0.0
    %493 = vmatpush1.msra.mxu0 %v392
    %494 = vmatprep.subr.mxu0 0.0
    %495 = vmatpush1.msra.mxu0 %v389
    %496 = vmatprep.subr.mxu0 0.0
    %497 = vmatpush1.msra.mxu0 %v386
    %498 = vmatprep.subr.mxu0 0.0
    %499 = vmatpush1.msra.mxu0 %v383
    %500 = vmatprep.subr.mxu0 0.0
    %501 = vmatpush1.msra.mxu0 %v380
    %502 = vmatprep.subr.mxu0 0.0
    %503 = vmatpush1.msra.mxu0 %v377
    %504 = vmatprep.subr.mxu0 0.0
    %505 = vmatpush1.msra.mxu0 %v374
    %506 = vmatprep.subr.mxu0 0.0
    %507 = vmatpush1.msra.mxu0 %v371
    %508 = vmatprep.subr.mxu0 0.0
    %509 = vmatpush1.msra.mxu0 %v368
    %510 = vmatprep.subr.mxu0 0.0
    %511 = vmatpush1.msra.mxu0 %v365
    %512 = vmatprep.subr.mxu0 0.0
    %513 = vmatpush1.msra.mxu0 %v362
    %514 = vmatprep.subr.mxu0 0.0
    %515 = vmatpush1.msra.mxu0 %v359
    %516 = vmatprep.subr.mxu0 0.0
    %517 = vmatpush1.msra.mxu0 %v356
    %518 = vmatprep.subr.mxu0 0.0
    %519 = vmatpush1.msra.mxu0 %v353
    %520 = vmatprep.subr.mxu0 0.0
    %521 = vmatpush1.msra.mxu0 %v350
    %522 = vmatprep.subr.mxu0 0.0
    %523 = vmatpush2.msra.mxu0 0.0
    %524 = vmatprep.subr.mxu0 0.0
    %525 = vmatpush2.msra.mxu0 0.0
    %526 = vmatprep.subr.mxu0 0.0
    %527 = vmatpush2.msra.mxu0 0.0
    %528 = vmatprep.subr.mxu0 0.0
    %529 = vmatpush2.msra.mxu0 0.0
    %530 = vmatprep.subr.mxu0 0.0
    %531 = vmatpush2.msra.mxu0 0.0
    %532 = vmatprep.subr.mxu0 0.0
    %533 = vmatpush2.msra.mxu0 0.0
    %534 = vmatprep.subr.mxu0 0.0
    %535 = vmatpush2.msra.mxu0 0.0
    %536 = vmatprep.subr.mxu0 0.0
    %537 = vmatpush2.msra.mxu0 0.0
    %538 = vmatprep.subr.mxu0 0.0
    %539 = vmatpush2.msra.mxu0 0.0
    %540 = vmatprep.subr.mxu0 0.0
    %541 = vmatpush2.msra.mxu0 0.0
    %542 = vmatprep.subr.mxu0 0.0
    %543 = vmatpush2.msra.mxu0 0.0
    %544 = vmatprep.subr.mxu0 0.0
    %545 = vmatpush2.msra.mxu0 0.0
    %546 = vmatprep.subr.mxu0 0.0
    %547 = vmatpush2.msra.mxu0 0.0
    %548 = vmatprep.subr.mxu0 0.0
    %549 = vmatpush2.msra.mxu0 0.0
    %550 = vmatprep.subr.mxu0 0.0
    %551 = vmatpush2.msra.mxu0 0.0
    %552 = vmatprep.subr.mxu0 0.0
    %553 = vmatpush2.msra.mxu0 0.0
    %554 = vmatprep.mubr.f32.mxu0 0.0
    %555 = vmatmul.mubr.f32.gmra.mxu0 %v340
    %v556 = vpop.f32.mrf.mxu0
    %v557 = vadd.f32 %v409, %v556
    %v558 = vpop.f32.mrf.mxu0
    %559 = vmatprep.mubr.f32.mxu0 0.0
    %560 = vmatmul.mubr.f32.gmra.mxu0 %v345
    %v561 = vpop.f32.mrf.mxu0
    %v562 = vadd.f32 %v409, %v561
    %v563 = vpop.f32.mrf.mxu0
    %564 = vdwg.mxu0
    %565 = vst [vmem:[#allocation2] sm:$0xff] %v480
    %566 = vst [vmem:[#allocation2 + $0x8] sm:$0xff] %v482
    %567 = vst [vmem:[#allocation2 + $0x10] sm:$0xff] %v557
    %568 = vst [vmem:[#allocation2 + $0x18] sm:$0xff] %v486
    %569 = vst [vmem:[#allocation2 + $0x20] sm:$0xff] %v488
    %570 = vst [vmem:[#allocation2 + $0x28] sm:$0xff] %v562
    %v571 = vld [vmem:[#allocation9] sm:$0xff]
    %v572 = vld [vmem:[#allocation9 + $0x8] sm:$0xff]
    %v573 = vld [vmem:[#allocation9 + $0x10] sm:$0xff]
    %v574 = vld [vmem:[#allocation9 + $0x18] sm:$0xff]
    %v575 = vld [vmem:[#allocation9 + $0x20] sm:$0xff]
    %v576 = vld [vmem:[#allocation9 + $0x28] sm:$0xff]
    %v577 = vld [vmem:[#allocation9 + $0x30] sm:$0xff]
    %v578 = vld [vmem:[#allocation9 + $0x38] sm:$0xff]
    %v579 = vld [vmem:[#allocation9 + $0x40] sm:$0xff]
    %v580 = vld [vmem:[#allocation9 + $0x48] sm:$0xff]
    %v581 = vld [vmem:[#allocation9 + $0x50] sm:$0xff]
    %v582 = vld [vmem:[#allocation9 + $0x58] sm:$0xff]
    %v583 = vld [vmem:[#allocation9 + $0x60] sm:$0xff]
    %v584 = vld [vmem:[#allocation9 + $0x68] sm:$0xff]
    %v585 = vld [vmem:[#allocation9 + $0x70] sm:$0xff]
    %v586 = vld [vmem:[#allocation9 + $0x78] sm:$0xff]
    %v587 = vld [vmem:[#allocation9 + $0x80] sm:$0xff]
    %v588 = vld [vmem:[#allocation9 + $0x88] sm:$0xff]
    %v589 = vld [vmem:[#allocation9 + $0x90] sm:$0xff]
    %v590 = vld [vmem:[#allocation9 + $0x98] sm:$0xff]
    %v591 = vld [vmem:[#allocation9 + $0xa0] sm:$0xff]
    %v592 = vld [vmem:[#allocation9 + $0xa8] sm:$0xff]
    %v593 = vld [vmem:[#allocation9 + $0xb0] sm:$0xff]
    %v594 = vld [vmem:[#allocation9 + $0xb8] sm:$0xff]
    %v595 = vld [vmem:[#allocation9 + $0xc0] sm:$0xff]
    %v596 = vld [vmem:[#allocation9 + $0xc8] sm:$0xff]
    %v597 = vld [vmem:[#allocation9 + $0xd0] sm:$0xff]
    %v598 = vld [vmem:[#allocation9 + $0xd8] sm:$0xff]
    %v599 = vld [vmem:[#allocation9 + $0xe0] sm:$0xff]
    %v600 = vld [vmem:[#allocation9 + $0xe8] sm:$0xff]
    %v601 = vld [vmem:[#allocation9 + $0xf0] sm:$0xff]
    %v602 = vld [vmem:[#allocation9 + $0xf8] sm:$0xff]
    %v603 = vld [vmem:[#allocation9 + $0x100] sm:$0xff]
    %v604 = vld [vmem:[#allocation9 + $0x108] sm:$0xff]
    %v605 = vld [vmem:[#allocation9 + $0x110] sm:$0xff]
    %v606 = vld [vmem:[#allocation9 + $0x118] sm:$0xff]
    %v607 = vld [vmem:[#allocation9 + $0x120] sm:$0xff]
    %v608 = vld [vmem:[#allocation9 + $0x128] sm:$0xff]
    %v609 = vld [vmem:[#allocation9 + $0x130] sm:$0xff]
    %v610 = vld [vmem:[#allocation9 + $0x138] sm:$0xff]
    %v611 = vld [vmem:[#allocation9 + $0x140] sm:$0xff]
    %v612 = vld [vmem:[#allocation9 + $0x148] sm:$0xff]
    %v613 = vld [vmem:[#allocation9 + $0x150] sm:$0xff]
    %v614 = vld [vmem:[#allocation9 + $0x158] sm:$0xff]
    %v615 = vld [vmem:[#allocation9 + $0x160] sm:$0xff]
    %v616 = vld [vmem:[#allocation9 + $0x168] sm:$0xff]
    %v617 = vld [vmem:[#allocation9 + $0x170] sm:$0xff]
    %v618 = vld [vmem:[#allocation9 + $0x178] sm:$0xff]
    %v619 = vld [vmem:[%s10] sm:$0x7]
    loop: start=0, step=1, limit=16
    $region62: #{imbgnn_forward.3} parent=1 // loop_pre_header
      _
    $region63: #{imbgnn_forward.3} parent=1 // loop_header
      %s621 = sphi 0, %s625
      %p622 = scmp.ge.s32.totalorder %s621, 16
      %v626 = vphi 0.0, %v818
    $region64: #{imbgnn_forward.3} parent=1 // loop_header_branch
      %624 = sbr.rel (%p622) target = $region68
    $region65: #{imbgnn_forward.3} parent=1 // loop_body
      %v628 = vlaneseq
      %v629 = vshrl.u32 %v628, 7
      %v630 = vsub.s32 0, %v629
      %v631 = vrot.slane %v619, %v630
      %v632 = vlaneseq
      %v633 = vshrl.u32 %v632, 7
      %v634 = vsub.s32 1, %v633
      %v635 = vrot.slane %v619, %v634
      %v636 = vlaneseq
      %v637 = vshrl.u32 %v636, 7
      %v638 = vsub.s32 2, %v637
      %v639 = vrot.slane %v619, %v638
      %643 = vmatprep.subr.mxu0 %v617
      %644 = vmatpush1.msra.mxu0 %v616
      %645 = vmatprep.subr.mxu0 %v614
      %646 = vmatpush1.msra.mxu0 %v613
      %647 = vmatprep.subr.mxu0 %v611
      %648 = vmatpush1.msra.mxu0 %v610
      %649 = vmatprep.subr.mxu0 %v608
      %650 = vmatpush1.msra.mxu0 %v607
      %651 = vmatprep.subr.mxu0 %v605
      %652 = vmatpush1.msra.mxu0 %v604
      %653 = vmatprep.subr.mxu0 %v602
      %654 = vmatpush1.msra.mxu0 %v601
      %655 = vmatprep.subr.mxu0 %v599
      %656 = vmatpush1.msra.mxu0 %v598
      %657 = vmatprep.subr.mxu0 %v596
      %658 = vmatpush1.msra.mxu0 %v595
      %659 = vmatprep.subr.mxu0 %v593
      %660 = vmatpush1.msra.mxu0 %v592
      %661 = vmatprep.subr.mxu0 %v590
      %662 = vmatpush1.msra.mxu0 %v589
      %663 = vmatprep.subr.mxu0 %v587
      %664 = vmatpush1.msra.mxu0 %v586
      %665 = vmatprep.subr.mxu0 %v584
      %666 = vmatpush1.msra.mxu0 %v583
      %667 = vmatprep.subr.mxu0 %v581
      %668 = vmatpush1.msra.mxu0 %v580
      %669 = vmatprep.subr.mxu0 %v578
      %670 = vmatpush1.msra.mxu0 %v577
      %671 = vmatprep.subr.mxu0 %v575
      %672 = vmatpush1.msra.mxu0 %v574
      %673 = vmatprep.subr.mxu0 %v572
      %674 = vmatpush1.msra.mxu0 %v571
      %675 = vmatprep.subr.mxu0 0.0
      %676 = vmatpush2.msra.mxu0 0.0
      %677 = vmatprep.subr.mxu0 0.0
      %678 = vmatpush2.msra.mxu0 0.0
      %679 = vmatprep.subr.mxu0 0.0
      %680 = vmatpush2.msra.mxu0 0.0
      %681 = vmatprep.subr.mxu0 0.0
      %682 = vmatpush2.msra.mxu0 0.0
      %683 = vmatprep.subr.mxu0 0.0
      %684 = vmatpush2.msra.mxu0 0.0
      %685 = vmatprep.subr.mxu0 0.0
      %686 = vmatpush2.msra.mxu0 0.0
      %687 = vmatprep.subr.mxu0 0.0
      %688 = vmatpush2.msra.mxu0 0.0
      %689 = vmatprep.subr.mxu0 0.0
      %690 = vmatpush2.msra.mxu0 0.0
      %691 = vmatprep.subr.mxu0 0.0
      %692 = vmatpush2.msra.mxu0 0.0
      %693 = vmatprep.subr.mxu0 0.0
      %694 = vmatpush2.msra.mxu0 0.0
      %695 = vmatprep.subr.mxu0 0.0
      %696 = vmatpush2.msra.mxu0 0.0
      %697 = vmatprep.subr.mxu0 0.0
      %698 = vmatpush2.msra.mxu0 0.0
      %699 = vmatprep.subr.mxu0 0.0
      %700 = vmatpush2.msra.mxu0 0.0
      %701 = vmatprep.subr.mxu0 0.0
      %702 = vmatpush2.msra.mxu0 0.0
      %703 = vmatprep.subr.mxu0 0.0
      %704 = vmatpush2.msra.mxu0 0.0
      %705 = vmatprep.subr.mxu0 0.0
      %706 = vmatpush2.msra.mxu0 0.0
      %707 = vmatprep.mubr.f32.mxu0 0.0
      %708 = vmatmul.mubr.f32.gmra.mxu0 %v626
      %v709 = vpop.f32.mrf.mxu0
      %v710 = vadd.f32 %v631, %v709
      %v711 = vpop.f32.mrf.mxu0
      %v712 = vadd.f32 %v635, %v711
      %713 = vdwg.mxu0
      %714 = vmatprep.subr.mxu0 0.0
      %715 = vmatpush1.msra.mxu0 %v618
      %716 = vmatprep.subr.mxu0 0.0
      %717 = vmatpush1.msra.mxu0 %v615
      %718 = vmatprep.subr.mxu0 0.0
      %719 = vmatpush1.msra.mxu0 %v612
      %720 = vmatprep.subr.mxu0 0.0
      %721 = vmatpush1.msra.mxu0 %v609
      %722 = vmatprep.subr.mxu0 0.0
      %723 = vmatpush1.msra.mxu0 %v606
      %724 = vmatprep.subr.mxu0 0.0
      %725 = vmatpush1.msra.mxu0 %v603
      %726 = vmatprep.subr.mxu0 0.0
      %727 = vmatpush1.msra.mxu0 %v600
      %728 = vmatprep.subr.mxu0 0.0
      %729 = vmatpush1.msra.mxu0 %v597
      %730 = vmatprep.subr.mxu0 0.0
      %731 = vmatpush1.msra.mxu0 %v594
      %732 = vmatprep.subr.mxu0 0.0
      %733 = vmatpush1.msra.mxu0 %v591
      %734 = vmatprep.subr.mxu0 0.0
      %735 = vmatpush1.msra.mxu0 %v588
      %736 = vmatprep.subr.mxu0 0.0
      %737 = vmatpush1.msra.mxu0 %v585
      %738 = vmatprep.subr.mxu0 0.0
      %739 = vmatpush1.msra.mxu0 %v582
      %740 = vmatprep.subr.mxu0 0.0
      %741 = vmatpush1.msra.mxu0 %v579
      %742 = vmatprep.subr.mxu0 0.0
      %743 = vmatpush1.msra.mxu0 %v576
      %744 = vmatprep.subr.mxu0 0.0
      %745 = vmatpush1.msra.mxu0 %v573
      %746 = vmatprep.subr.mxu0 0.0
      %747 = vmatpush2.msra.mxu0 0.0
      %748 = vmatprep.subr.mxu0 0.0
      %749 = vmatpush2.msra.mxu0 0.0
      %750 = vmatprep.subr.mxu0 0.0
      %751 = vmatpush2.msra.mxu0 0.0
      %752 = vmatprep.subr.mxu0 0.0
      %753 = vmatpush2.msra.mxu0 0.0
      %754 = vmatprep.subr.mxu0 0.0
      %755 = vmatpush2.msra.mxu0 0.0
      %756 = vmatprep.subr.mxu0 0.0
      %757 = vmatpush2.msra.mxu0 0.0
      %758 = vmatprep.subr.mxu0 0.0
      %759 = vmatpush2.msra.mxu0 0.0
      %760 = vmatprep.subr.mxu0 0.0
      %761 = vmatpush2.msra.mxu0 0.0
      %762 = vmatprep.subr.mxu0 0.0
      %763 = vmatpush2.msra.mxu0 0.0
      %764 = vmatprep.subr.mxu0 0.0
      %765 = vmatpush2.msra.mxu0 0.0
      %766 = vmatprep.subr.mxu0 0.0
      %767 = vmatpush2.msra.mxu0 0.0
      %768 = vmatprep.subr.mxu0 0.0
      %769 = vmatpush2.msra.mxu0 0.0
      %770 = vmatprep.subr.mxu0 0.0
      %771 = vmatpush2.msra.mxu0 0.0
      %772 = vmatprep.subr.mxu0 0.0
      %773 = vmatpush2.msra.mxu0 0.0
      %774 = vmatprep.subr.mxu0 0.0
      %775 = vmatpush2.msra.mxu0 0.0
      %776 = vmatprep.subr.mxu0 0.0
      %777 = vmatpush2.msra.mxu0 0.0
      %778 = vmatprep.mubr.f32.mxu0 0.0
      %779 = vmatmul.mubr.f32.gmra.mxu0 %v626
      %v780 = vpop.f32.mrf.mxu0
      %v781 = vadd.f32 %v639, %v780
      %v782 = vpop.f32.mrf.mxu0
      %783 = vdwg.mxu0
      %s784 = sshra.s32 %s621, 3
      %s785 = sand.u32 %s621, 7
      %s786 = sshra.s32 %s621, 3
      %s787 = sand.u32 %s621, 7
      %s788 = smul.u32 %s784, 3
      %s789 = smul.u32 %s788, 8
      %s790 = sadd.s32 %s789, %s787
      %s791 = scalar_lea.vmem [#allocation2], %s790
      %v792 = vld [vmem:[%s791] ss:$8 sm:$0x7]
      %v793 = vadd.f32 %v792, %v710
      %v794 = vxor.u32 %v793, 2147483648
      %v795 = vmul.f32 %v794, 1.442695
      %v796 = vpow.pop %v795
      %v797 = vadd.f32 %v796, 1.0
      %v798 = vrcp.pop %v797
      %v799 = vmul.f32 1.0, %v798
      %v801 = vrot.slane %v792, 1
      %v803 = vadd.f32 %v801, %v712
      %v804 = vxor.u32 %v803, 2147483648
      %v805 = vmul.f32 %v804, 1.442695
      %v806 = vpow.pop %v805
      %v807 = vadd.f32 %v806, 1.0
      %v808 = vrcp.pop %v807
      %v809 = vmul.f32 1.0, %v808
      %v810 = vmul.f32 %v799, %v781
      %v811 = vrot.slane %v792, 2
      %v813 = vadd.f32 %v811, %v810
      %v814 = vtanh.pop %v813
      %v815 = vsub.f32 1.0, %v809
      %v816 = vmul.f32 %v815, %v814
      %v817 = vmul.f32 %v809, %v626
      %v818 = vadd.f32 %v816, %v817
      %s819 = scalar_lea.vmem [#allocation3], %s621
      %820 = vst [vmem:[%s819] sm:$0x1] %v818
    $region66: #{imbgnn_forward.3} parent=1 // loop_footer
      %s625 = sadd.s32 1, %s621
    $region67: #{imbgnn_forward.3} parent=1 // loop_footer_branch
      %620 = sbr.rel target = $region63
    $region68: #{imbgnn_forward.3} parent=1 // loop_exit
      _
    %v821 = vld [vmem:[#allocation3] sm:$0xff]
    %v822 = vld [vmem:[#allocation3 + $0x8] sm:$0xff]
    %v823 = vmul.f32 %v248, %v821
    %v824 = vmul.f32 %v249, %v822
    %825 = vst [vmem:[%s11] sm:$0xff] %v823
    %826 = vst [vmem:[%s11 + $0x8] sm:$0xff] %v824
    // Predicated region
    $region69: #{imbgnn_forward.3} parent=1 // pred_check
      _
    $region70: #{imbgnn_forward.3} parent=1 // pred_check_branch
      %828 = sbr.rel (0) target = $region72
    $region71: #{imbgnn_forward.3} parent=1 // pred_region
      _
    $region72: #{imbgnn_forward.3} parent=1 // pred_fallthru
      _
    // Predicated region
    $region73: #{imbgnn_forward.3} parent=1 // pred_check
      _
    $region74: #{imbgnn_forward.3} parent=1 // pred_check_branch
      %830 = sbr.rel (0) target = $region76
    $region75: #{imbgnn_forward.3} parent=1 // pred_region
      _
    $region76: #{imbgnn_forward.3} parent=1 // pred_fallthru
      _
    %831 = vsyncpa [#allocation5], 1
    %832 = vsyncpa [#allocation7], 1
    %833 = vsyncpa [#allocation10], 1

</llo_original>
